<compile_context>
chip_gen: v7x
topology: tpu7x:2x2x1
jax: 0.10.0
libtpu: 0.0.40
codegen_flags: <defaults>
</compile_context>

<pallas_src>
import functools

import jax
import jax.numpy as jnp
from jax.experimental import pallas as pl
from jax.experimental.pallas import tpu as pltpu

# ---- synthetic architecture config (shapes implied by the module __init__) ----
LEVEL_NUM = 4        # part_group_config['level_num']
CHANNEL = 32         # level_1_config['channel'] (backbone feature channels)
KEYPOINTS = 8        # keypoints_num

# MXU operand dtype.  bf16 halves operand traffic and avoids multi-pass f32
# MXU emulation on v6e/v7x; accumulation, bias, residual add and ReLU always
# stay in f32 (also the right split on v5e, whose VPU has no bf16).
MATMUL_DTYPE = jnp.bfloat16


def _round_up(x, m):
    return ((x + m - 1) // m) * m


# ------------------------------ Pallas kernel ---------------------------------
def _fused_part_group_kernel(x_ref, wbb_ref, bbb_ref, wf_ref, bf_ref,
                             wr_ref, br_ref, wl_ref, bl_ref, out_ref, *,
                             level_num, keypoints, matmul_dtype):
    """Whole multi-level head for one (batch, spatial-tile) grid step.

    Channel-major layout: activations are (C, t) with the spatial/token axis on
    lanes (t is a multiple of 128), so every 1x1 conv is W(Cout,Cin) @ X(Cin,t)
    and every load/store is lane-dense.  `feat` never leaves the core between
    levels.  Prediction heads are fused row-wise with the conv that consumes
    the same feature (origin+residual-branch, pred+grouping).
    """
    k = keypoints

    def dot_bias(w, inp, b):
        # w is pre-stored in matmul_dtype; accumulate in f32, add f32 bias.
        return jnp.dot(w, inp.astype(matmul_dtype),
                       preferred_element_type=jnp.float32) + b

    x = x_ref[...]                                                  # (Cin, t) f32

    # Backbone, simplified to one channel-mixing 1x1 conv + ReLU.
    # TODO(synk): the real backbone (hourglass / spatial convs) is an external
    # module and is not reproduced here.
    feat = jnp.maximum(dot_bias(wbb_ref[...], x, bbb_ref[...]), 0.0)  # (C, t)

    # Fused [origin_predict_layer ; group_levels[0] residual branch].
    # TODO(synk): the real Residual block contains BN and a 3x3 bottleneck; it
    # is approximated here as  x + relu(conv1x1(x))  (skip add, no post-ReLU).
    y = dot_bias(wf_ref[0], feat, bf_ref[0])                        # (K+C, t)
    out_ref[0:k, :] = y[0:k].astype(out_ref.dtype)                  # origin preds
    feat = feat + jnp.maximum(y[k:], 0.0)                           # level-0 feat

    for j in range(1, level_num):
        # Fused [level (j-1) predict conv ; grouping (j-1)->j conv].
        # TODO(synk): searched grouping ops (alphas/betas mixtures) are reduced
        # to a single derived 1x1 conv.
        y = dot_bias(wf_ref[j], feat, bf_ref[j])                    # (K+C, t)
        out_ref[j * k:(j + 1) * k, :] = y[0:k].astype(out_ref.dtype)
        featg = jnp.maximum(y[k:], 0.0)                             # grouped feat
        # group_levels[j]: residual-style feature update.
        feat = featg + jnp.maximum(
            dot_bias(wr_ref[j - 1], featg, br_ref[j - 1]), 0.0)

    # Final level prediction (no following grouping -> stand-alone matmul).
    out_ref[level_num * k:(level_num + 1) * k, :] = dot_bias(
        wl_ref[...], feat, bl_ref[...]).astype(out_ref.dtype)


# ----------------------------- parameter setup --------------------------------
def init_params(key, in_channels, *, matmul_dtype=MATMUL_DTYPE):
    """Deterministic synthetic weights, pre-packed/fused for the kernel.

    Weight matrices are stored channel-major (Cout, Cin) in `matmul_dtype`;
    biases are separate f32 (Cout, 1) columns (no in-kernel re-slicing).
    Prediction heads are row-concatenated with the conv that shares their
    input feature so the kernel issues one MXU op per pair.
    """
    def dense(k, cout, cin):
        kw, kb = jax.random.split(k)
        w = jax.random.normal(kw, (cout, cin), jnp.float32) / jnp.sqrt(float(cin))
        b = 0.01 * jax.random.normal(kb, (cout,), jnp.float32)
        return w, b

    keys = jax.random.split(key, 2 + 3 * LEVEL_NUM)
    w_bb, b_bb = dense(keys[0], CHANNEL, in_channels)
    w_origin, b_origin = dense(keys[1], KEYPOINTS, CHANNEL)

    w_res, b_res = [], []     # group_levels[i] residual-branch convs, i = 0..L-1
    w_pred, b_pred = [], []   # group_levels[i] predict convs,         i = 0..L-1
    w_grp, b_grp = [], []     # groupings[i] convs,                    i = 0..L-2
    for i in range(LEVEL_NUM):
        w, b = dense(keys[2 + 3 * i], CHANNEL, CHANNEL)
        w_res.append(w); b_res.append(b)
        w, b = dense(keys[3 + 3 * i], KEYPOINTS, CHANNEL)
        w_pred.append(w); b_pred.append(b)
        if i < LEVEL_NUM - 1:
            w, b = dense(keys[4 + 3 * i], CHANNEL, CHANNEL)
            w_grp.append(w); b_grp.append(b)

    # Fused (K+C, C) matrices:
    #   F[0] = [origin predict ; level-0 residual branch]   (applied to backbone feat)
    #   F[j] = [level (j-1) predict ; grouping (j-1)->j]    (applied to level (j-1) feat)
    wf = [jnp.concatenate([w_origin, w_res[0]], axis=0)]
    bf = [jnp.concatenate([b_origin, b_res[0]], axis=0)]
    for j in range(1, LEVEL_NUM):
        wf.append(jnp.concatenate([w_pred[j - 1], w_grp[j - 1]], axis=0))
        bf.append(jnp.concatenate([b_pred[j - 1], b_grp[j - 1]], axis=0))

    stack_w = lambda ws: jnp.stack(ws).astype(matmul_dtype)
    stack_b = lambda bs: jnp.stack(bs)[..., None]          # (n, Cout, 1) f32

    return {
        "w_bb": w_bb.astype(matmul_dtype),                 # (C, Cin)
        "b_bb": b_bb[:, None],                             # (C, 1)
        "w_fused": stack_w(wf),                            # (L, K+C, C)
        "b_fused": stack_b(bf),                            # (L, K+C, 1)
        "w_res": stack_w(w_res[1:]),                       # (L-1, C, C)
        "b_res": stack_b(b_res[1:]),                       # (L-1, C, 1)
        "w_last": w_pred[LEVEL_NUM - 1].astype(matmul_dtype),   # (K, C)
        "b_last": b_pred[LEVEL_NUM - 1][:, None],          # (K, 1)
    }


# -------------------------------- forward -------------------------------------
def derived_part_group_network_forward(params, x, *, matmul_dtype=MATMUL_DTYPE):
    """x: (B, C_in, H, W) NCHW -> (B, LEVEL_NUM + 1, KEYPOINTS, H, W)."""
    B, cin, H, W = x.shape
    HW = H * W
    heads = LEVEL_NUM + 1
    kout = heads * KEYPOINTS
    kc = KEYPOINTS + CHANNEL

    # NCHW -> channel-major tokens (B, Cin, H*W).  Pure reshape, no transpose.
    x_cm = x.reshape(B, cin, HW)

    # Spatial tile: lane-dense (multiple of 128), large enough to amortize the
    # ~0.35 us per-grid-step overhead; per-step VMEM footprint stays far below
    # even v7x's 64 MiB.
    t = min(1024, _round_up(HW, 128))
    n_t = pl.cdiv(HW, t)
    # v7x megacore: guarantee >= 2 grid steps so both TensorCores get work.
    if B == 1 and n_t == 1 and HW > 128:
        t = _round_up((HW + 1) // 2, 128)
        n_t = pl.cdiv(HW, t)
    hw_pad = n_t * t
    if hw_pad != HW:
        x_cm = jnp.pad(x_cm, ((0, 0), (0, 0), (0, hw_pad - HW)))

    kernel = functools.partial(
        _fused_part_group_kernel,
        level_num=LEVEL_NUM, keypoints=KEYPOINTS, matmul_dtype=matmul_dtype)

    const2 = lambda b, j: (0, 0)
    const3 = lambda b, j: (0, 0, 0)

    out = pl.pallas_call(
        kernel,
        out_shape=jax.ShapeDtypeStruct((B, kout, hw_pad), jnp.float32),
        grid_spec=pltpu.PrefetchScalarGridSpec(
            num_scalar_prefetch=0,
            grid=(B, n_t),
            in_specs=[
                # activation tile (Cin, t), tokens on lanes
                pl.BlockSpec((None, cin, t), lambda b, j: (b, 0, j)),
                # weights / biases: full arrays, constant index -> VMEM-resident
                pl.BlockSpec((CHANNEL, cin), const2),
                pl.BlockSpec((CHANNEL, 1), const2),
                pl.BlockSpec((LEVEL_NUM, kc, CHANNEL), const3),
                pl.BlockSpec((LEVEL_NUM, kc, 1), const3),
                pl.BlockSpec((LEVEL_NUM - 1, CHANNEL, CHANNEL), const3),
                pl.BlockSpec((LEVEL_NUM - 1, CHANNEL, 1), const3),
                pl.BlockSpec((KEYPOINTS, CHANNEL), const2),
                pl.BlockSpec((KEYPOINTS, 1), const2),
            ],
            out_specs=pl.BlockSpec((None, kout, t), lambda b, j: (b, 0, j)),
        ),
        compiler_params=pltpu.CompilerParams(
            dimension_semantics=("parallel", "parallel")),
    )(x_cm,
      params["w_bb"], params["b_bb"],
      params["w_fused"], params["b_fused"],
      params["w_res"], params["b_res"],
      params["w_last"], params["b_last"])

    # (B, 5K, HW_pad) -> strip padding -> (B, levels+1, K, H, W); pure reshape,
    # matches torch.stack(all_level_predictions, dim=1) on NCHW heatmaps.
    out = out[:, :, :HW]
    return out.reshape(B, heads, KEYPOINTS, H, W)


# --------------------------------- main ----------------------------------------
if __name__ == "__main__":
    key = jax.random.PRNGKey(0)
    k_x, k_p = jax.random.split(key)

    B, C_IN, H, W = 2, 4, 16, 16
    x = jax.random.normal(k_x, (B, C_IN, H, W), jnp.float32)
    params = init_params(k_p, C_IN)

    fwd = jax.jit(derived_part_group_network_forward)
    out = jax.block_until_ready(fwd(params, x))

    assert out.shape == (B, LEVEL_NUM + 1, KEYPOINTS, H, W), out.shape
    assert out.dtype == jnp.float32
    assert bool(jnp.all(jnp.isfinite(out)))
    print("KERNEL_OK")
</pallas_src>

<mosaic_0001>
module attributes {stable_mosaic.version = 11 : i64} {
  func.func @_fused_part_group_kernel(%arg0: i32, %arg1: i32, %arg2: memref<1x4x256xf32, #tpu.memory_space<vmem>>, %arg3: memref<32x4xbf16, #tpu.memory_space<vmem>>, %arg4: memref<32x1xf32, #tpu.memory_space<vmem>>, %arg5: memref<4x40x32xbf16, #tpu.memory_space<vmem>>, %arg6: memref<4x40x1xf32, #tpu.memory_space<vmem>>, %arg7: memref<3x32x32xbf16, #tpu.memory_space<vmem>>, %arg8: memref<3x32x1xf32, #tpu.memory_space<vmem>>, %arg9: memref<8x32xbf16, #tpu.memory_space<vmem>>, %arg10: memref<8x1xf32, #tpu.memory_space<vmem>>, %arg11: memref<1x40x256xf32, #tpu.memory_space<vmem>>) attributes {dimension_semantics = [#tpu.dimension_semantics<parallel>, #tpu.dimension_semantics<parallel>], iteration_bounds = array<i64: 2, 1>, scalar_prefetch = 0 : i64, scratch_operands = 0 : i64, tpu.core_type = #tpu.core_type<tc>, window_params = [{transform_indices = @transform_0, window_bounds = array<i64: 1, 4, 256>}, {pipeline_mode = #tpu.pipeline_mode<synchronous>, transform_indices = @transform_1, window_bounds = array<i64: 32, 4>}, {pipeline_mode = #tpu.pipeline_mode<synchronous>, transform_indices = @transform_2, window_bounds = array<i64: 32, 1>}, {pipeline_mode = #tpu.pipeline_mode<synchronous>, transform_indices = @transform_3, window_bounds = array<i64: 4, 40, 32>}, {pipeline_mode = #tpu.pipeline_mode<synchronous>, transform_indices = @transform_4, window_bounds = array<i64: 4, 40, 1>}, {pipeline_mode = #tpu.pipeline_mode<synchronous>, transform_indices = @transform_5, window_bounds = array<i64: 3, 32, 32>}, {pipeline_mode = #tpu.pipeline_mode<synchronous>, transform_indices = @transform_6, window_bounds = array<i64: 3, 32, 1>}, {pipeline_mode = #tpu.pipeline_mode<synchronous>, transform_indices = @transform_7, window_bounds = array<i64: 8, 32>}, {pipeline_mode = #tpu.pipeline_mode<synchronous>, transform_indices = @transform_8, window_bounds = array<i64: 8, 1>}, {transform_indices = @transform_9, window_bounds = array<i64: 1, 40, 256>}]} {
    %c0 = arith.constant 0 : index
    %c0_0 = arith.constant 0 : index
    %c0_1 = arith.constant 0 : index
    %0 = vector.load %arg2[%c0, %c0_0, %c0_1] : memref<1x4x256xf32, #tpu.memory_space<vmem>>, vector<1x4x256xf32>
    %1 = vector.shape_cast %0 : vector<1x4x256xf32> to vector<4x256xf32>
    %c0_2 = arith.constant 0 : index
    %c0_3 = arith.constant 0 : index
    %2 = vector.load %arg3[%c0_2, %c0_3] : memref<32x4xbf16, #tpu.memory_space<vmem>>, vector<32x4xbf16>
    %c0_4 = arith.constant 0 : index
    %c0_5 = arith.constant 0 : index
    %3 = vector.load %arg4[%c0_4, %c0_5] : memref<32x1xf32, #tpu.memory_space<vmem>>, vector<32x1xf32>
    %4 = arith.truncf %1 : vector<4x256xf32> to vector<4x256xbf16>
    %cst = arith.constant dense<0.000000e+00> : vector<32x256xf32>
    %5 = tpu.matmul %2, %4, %cst {dimension_numbers = #tpu.dot_dimension_numbers<[1], [0], [0], [1], [0, 0, 1, 1], [], []>} : vector<32x4xbf16>, vector<4x256xbf16>, vector<32x256xf32> -> vector<32x256xf32>
    %6 = vector.broadcast %3 : vector<32x1xf32> to vector<32x256xf32>
    %7 = arith.addf %5, %6 : vector<32x256xf32>
    %cst_6 = arith.constant 0.000000e+00 : f32
    %8 = vector.broadcast %cst_6 : f32 to vector<32x256xf32>
    %9 = arith.maximumf %7, %8 : vector<32x256xf32>
    %c0_7 = arith.constant 0 : index
    %c0_8 = arith.constant 0 : index
    %c0_9 = arith.constant 0 : index
    %10 = vector.load %arg5[%c0_7, %c0_8, %c0_9] : memref<4x40x32xbf16, #tpu.memory_space<vmem>>, vector<1x40x32xbf16>
    %11 = vector.shape_cast %10 : vector<1x40x32xbf16> to vector<40x32xbf16>
    %c0_10 = arith.constant 0 : index
    %c0_11 = arith.constant 0 : index
    %c0_12 = arith.constant 0 : index
    %12 = vector.load %arg6[%c0_10, %c0_11, %c0_12] : memref<4x40x1xf32, #tpu.memory_space<vmem>>, vector<1x40x1xf32>
    %13 = vector.shape_cast %12 : vector<1x40x1xf32> to vector<40x1xf32>
    %14 = arith.truncf %9 : vector<32x256xf32> to vector<32x256xbf16>
    %cst_13 = arith.constant dense<0.000000e+00> : vector<40x256xf32>
    %15 = tpu.matmul %11, %14, %cst_13 {dimension_numbers = #tpu.dot_dimension_numbers<[1], [0], [0], [1], [0, 0, 1, 1], [], []>} : vector<40x32xbf16>, vector<32x256xbf16>, vector<40x256xf32> -> vector<40x256xf32>
    %16 = vector.broadcast %13 : vector<40x1xf32> to vector<40x256xf32>
    %17 = arith.addf %15, %16 : vector<40x256xf32>
    %18 = vector.extract_strided_slice %17 {offsets = [0, 0], sizes = [8, 256], strides = [1, 1]} : vector<40x256xf32> to vector<8x256xf32>
    %c0_14 = arith.constant 0 : index
    %c0_15 = arith.constant 0 : index
    %c0_16 = arith.constant 0 : index
    %19 = vector.load %arg11[%c0_14, %c0_15, %c0_16] : memref<1x40x256xf32, #tpu.memory_space<vmem>>, vector<1x8x256xf32>
    %20 = vector.shape_cast %19 : vector<1x8x256xf32> to vector<8x256xf32>
    %21 = vector.shape_cast %18 : vector<8x256xf32> to vector<1x8x256xf32>
    tpu.vector_store %arg11[%c0_14, %c0_15, %c0_16], %21 {strides = array<i32>} : memref<1x40x256xf32, #tpu.memory_space<vmem>>, vector<1x8x256xf32>,
    %22 = vector.extract_strided_slice %17 {offsets = [8, 0], sizes = [32, 256], strides = [1, 1]} : vector<40x256xf32> to vector<32x256xf32>
    %cst_17 = arith.constant 0.000000e+00 : f32
    %23 = vector.broadcast %cst_17 : f32 to vector<32x256xf32>
    %24 = arith.maximumf %22, %23 : vector<32x256xf32>
    %25 = arith.addf %9, %24 : vector<32x256xf32>
    %c1 = arith.constant 1 : index
    %c0_18 = arith.constant 0 : index
    %c0_19 = arith.constant 0 : index
    %26 = vector.load %arg5[%c1, %c0_18, %c0_19] : memref<4x40x32xbf16, #tpu.memory_space<vmem>>, vector<1x40x32xbf16>
    %27 = vector.shape_cast %26 : vector<1x40x32xbf16> to vector<40x32xbf16>
    %c1_20 = arith.constant 1 : index
    %c0_21 = arith.constant 0 : index
    %c0_22 = arith.constant 0 : index
    %28 = vector.load %arg6[%c1_20, %c0_21, %c0_22] : memref<4x40x1xf32, #tpu.memory_space<vmem>>, vector<1x40x1xf32>
    %29 = vector.shape_cast %28 : vector<1x40x1xf32> to vector<40x1xf32>
    %30 = arith.truncf %25 : vector<32x256xf32> to vector<32x256xbf16>
    %cst_23 = arith.constant dense<0.000000e+00> : vector<40x256xf32>
    %31 = tpu.matmul %27, %30, %cst_23 {dimension_numbers = #tpu.dot_dimension_numbers<[1], [0], [0], [1], [0, 0, 1, 1], [], []>} : vector<40x32xbf16>, vector<32x256xbf16>, vector<40x256xf32> -> vector<40x256xf32>
    %32 = vector.broadcast %29 : vector<40x1xf32> to vector<40x256xf32>
    %33 = arith.addf %31, %32 : vector<40x256xf32>
    %34 = vector.extract_strided_slice %33 {offsets = [0, 0], sizes = [8, 256], strides = [1, 1]} : vector<40x256xf32> to vector<8x256xf32>
    %c0_24 = arith.constant 0 : index
    %c8 = arith.constant 8 : index
    %c0_25 = arith.constant 0 : index
    %35 = vector.load %arg11[%c0_24, %c8, %c0_25] : memref<1x40x256xf32, #tpu.memory_space<vmem>>, vector<1x8x256xf32>
    %36 = vector.shape_cast %35 : vector<1x8x256xf32> to vector<8x256xf32>
    %37 = vector.shape_cast %34 : vector<8x256xf32> to vector<1x8x256xf32>
    tpu.vector_store %arg11[%c0_24, %c8, %c0_25], %37 {strides = array<i32>} : memref<1x40x256xf32, #tpu.memory_space<vmem>>, vector<1x8x256xf32>,
    %38 = vector.extract_strided_slice %33 {offsets = [8, 0], sizes = [32, 256], strides = [1, 1]} : vector<40x256xf32> to vector<32x256xf32>
    %cst_26 = arith.constant 0.000000e+00 : f32
    %39 = vector.broadcast %cst_26 : f32 to vector<32x256xf32>
    %40 = arith.maximumf %38, %39 : vector<32x256xf32>
    %c0_27 = arith.constant 0 : index
    %c0_28 = arith.constant 0 : index
    %c0_29 = arith.constant 0 : index
    %41 = vector.load %arg7[%c0_27, %c0_28, %c0_29] : memref<3x32x32xbf16, #tpu.memory_space<vmem>>, vector<1x32x32xbf16>
    %42 = vector.shape_cast %41 : vector<1x32x32xbf16> to vector<32x32xbf16>
    %c0_30 = arith.constant 0 : index
    %c0_31 = arith.constant 0 : index
    %c0_32 = arith.constant 0 : index
    %43 = vector.load %arg8[%c0_30, %c0_31, %c0_32] : memref<3x32x1xf32, #tpu.memory_space<vmem>>, vector<1x32x1xf32>
    %44 = vector.shape_cast %43 : vector<1x32x1xf32> to vector<32x1xf32>
    %45 = arith.truncf %40 : vector<32x256xf32> to vector<32x256xbf16>
    %cst_33 = arith.constant dense<0.000000e+00> : vector<32x256xf32>
    %46 = tpu.matmul %42, %45, %cst_33 {dimension_numbers = #tpu.dot_dimension_numbers<[1], [0], [0], [1], [0, 0, 1, 1], [], []>} : vector<32x32xbf16>, vector<32x256xbf16>, vector<32x256xf32> -> vector<32x256xf32>
    %47 = vector.broadcast %44 : vector<32x1xf32> to vector<32x256xf32>
    %48 = arith.addf %46, %47 : vector<32x256xf32>
    %cst_34 = arith.constant 0.000000e+00 : f32
    %49 = vector.broadcast %cst_34 : f32 to vector<32x256xf32>
    %50 = arith.maximumf %48, %49 : vector<32x256xf32>
    %51 = arith.addf %40, %50 : vector<32x256xf32>
    %c2 = arith.constant 2 : index
    %c0_35 = arith.constant 0 : index
    %c0_36 = arith.constant 0 : index
    %52 = vector.load %arg5[%c2, %c0_35, %c0_36] : memref<4x40x32xbf16, #tpu.memory_space<vmem>>, vector<1x40x32xbf16>
    %53 = vector.shape_cast %52 : vector<1x40x32xbf16> to vector<40x32xbf16>
    %c2_37 = arith.constant 2 : index
    %c0_38 = arith.constant 0 : index
    %c0_39 = arith.constant 0 : index
    %54 = vector.load %arg6[%c2_37, %c0_38, %c0_39] : memref<4x40x1xf32, #tpu.memory_space<vmem>>, vector<1x40x1xf32>
    %55 = vector.shape_cast %54 : vector<1x40x1xf32> to vector<40x1xf32>
    %56 = arith.truncf %51 : vector<32x256xf32> to vector<32x256xbf16>
    %cst_40 = arith.constant dense<0.000000e+00> : vector<40x256xf32>
    %57 = tpu.matmul %53, %56, %cst_40 {dimension_numbers = #tpu.dot_dimension_numbers<[1], [0], [0], [1], [0, 0, 1, 1], [], []>} : vector<40x32xbf16>, vector<32x256xbf16>, vector<40x256xf32> -> vector<40x256xf32>
    %58 = vector.broadcast %55 : vector<40x1xf32> to vector<40x256xf32>
    %59 = arith.addf %57, %58 : vector<40x256xf32>
    %60 = vector.extract_strided_slice %59 {offsets = [0, 0], sizes = [8, 256], strides = [1, 1]} : vector<40x256xf32> to vector<8x256xf32>
    %c0_41 = arith.constant 0 : index
    %c16 = arith.constant 16 : index
    %c0_42 = arith.constant 0 : index
    %61 = vector.load %arg11[%c0_41, %c16, %c0_42] : memref<1x40x256xf32, #tpu.memory_space<vmem>>, vector<1x8x256xf32>
    %62 = vector.shape_cast %61 : vector<1x8x256xf32> to vector<8x256xf32>
    %63 = vector.shape_cast %60 : vector<8x256xf32> to vector<1x8x256xf32>
    tpu.vector_store %arg11[%c0_41, %c16, %c0_42], %63 {strides = array<i32>} : memref<1x40x256xf32, #tpu.memory_space<vmem>>, vector<1x8x256xf32>,
    %64 = vector.extract_strided_slice %59 {offsets = [8, 0], sizes = [32, 256], strides = [1, 1]} : vector<40x256xf32> to vector<32x256xf32>
    %cst_43 = arith.constant 0.000000e+00 : f32
    %65 = vector.broadcast %cst_43 : f32 to vector<32x256xf32>
    %66 = arith.maximumf %64, %65 : vector<32x256xf32>
    %c1_44 = arith.constant 1 : index
    %c0_45 = arith.constant 0 : index
    %c0_46 = arith.constant 0 : index
    %67 = vector.load %arg7[%c1_44, %c0_45, %c0_46] : memref<3x32x32xbf16, #tpu.memory_space<vmem>>, vector<1x32x32xbf16>
    %68 = vector.shape_cast %67 : vector<1x32x32xbf16> to vector<32x32xbf16>
    %c1_47 = arith.constant 1 : index
    %c0_48 = arith.constant 0 : index
    %c0_49 = arith.constant 0 : index
    %69 = vector.load %arg8[%c1_47, %c0_48, %c0_49] : memref<3x32x1xf32, #tpu.memory_space<vmem>>, vector<1x32x1xf32>
    %70 = vector.shape_cast %69 : vector<1x32x1xf32> to vector<32x1xf32>
    %71 = arith.truncf %66 : vector<32x256xf32> to vector<32x256xbf16>
    %cst_50 = arith.constant dense<0.000000e+00> : vector<32x256xf32>
    %72 = tpu.matmul %68, %71, %cst_50 {dimension_numbers = #tpu.dot_dimension_numbers<[1], [0], [0], [1], [0, 0, 1, 1], [], []>} : vector<32x32xbf16>, vector<32x256xbf16>, vector<32x256xf32> -> vector<32x256xf32>
    %73 = vector.broadcast %70 : vector<32x1xf32> to vector<32x256xf32>
    %74 = arith.addf %72, %73 : vector<32x256xf32>
    %cst_51 = arith.constant 0.000000e+00 : f32
    %75 = vector.broadcast %cst_51 : f32 to vector<32x256xf32>
    %76 = arith.maximumf %74, %75 : vector<32x256xf32>
    %77 = arith.addf %66, %76 : vector<32x256xf32>
    %c3 = arith.constant 3 : index
    %c0_52 = arith.constant 0 : index
    %c0_53 = arith.constant 0 : index
    %78 = vector.load %arg5[%c3, %c0_52, %c0_53] : memref<4x40x32xbf16, #tpu.memory_space<vmem>>, vector<1x40x32xbf16>
    %79 = vector.shape_cast %78 : vector<1x40x32xbf16> to vector<40x32xbf16>
    %c3_54 = arith.constant 3 : index
    %c0_55 = arith.constant 0 : index
    %c0_56 = arith.constant 0 : index
    %80 = vector.load %arg6[%c3_54, %c0_55, %c0_56] : memref<4x40x1xf32, #tpu.memory_space<vmem>>, vector<1x40x1xf32>
    %81 = vector.shape_cast %80 : vector<1x40x1xf32> to vector<40x1xf32>
    %82 = arith.truncf %77 : vector<32x256xf32> to vector<32x256xbf16>
    %cst_57 = arith.constant dense<0.000000e+00> : vector<40x256xf32>
    %83 = tpu.matmul %79, %82, %cst_57 {dimension_numbers = #tpu.dot_dimension_numbers<[1], [0], [0], [1], [0, 0, 1, 1], [], []>} : vector<40x32xbf16>, vector<32x256xbf16>, vector<40x256xf32> -> vector<40x256xf32>
    %84 = vector.broadcast %81 : vector<40x1xf32> to vector<40x256xf32>
    %85 = arith.addf %83, %84 : vector<40x256xf32>
    %86 = vector.extract_strided_slice %85 {offsets = [0, 0], sizes = [8, 256], strides = [1, 1]} : vector<40x256xf32> to vector<8x256xf32>
    %c0_58 = arith.constant 0 : index
    %c24 = arith.constant 24 : index
    %c0_59 = arith.constant 0 : index
    %87 = vector.load %arg11[%c0_58, %c24, %c0_59] : memref<1x40x256xf32, #tpu.memory_space<vmem>>, vector<1x8x256xf32>
    %88 = vector.shape_cast %87 : vector<1x8x256xf32> to vector<8x256xf32>
    %89 = vector.shape_cast %86 : vector<8x256xf32> to vector<1x8x256xf32>
    tpu.vector_store %arg11[%c0_58, %c24, %c0_59], %89 {strides = array<i32>} : memref<1x40x256xf32, #tpu.memory_space<vmem>>, vector<1x8x256xf32>,
    %90 = vector.extract_strided_slice %85 {offsets = [8, 0], sizes = [32, 256], strides = [1, 1]} : vector<40x256xf32> to vector<32x256xf32>
    %cst_60 = arith.constant 0.000000e+00 : f32
    %91 = vector.broadcast %cst_60 : f32 to vector<32x256xf32>
    %92 = arith.maximumf %90, %91 : vector<32x256xf32>
    %c2_61 = arith.constant 2 : index
    %c0_62 = arith.constant 0 : index
    %c0_63 = arith.constant 0 : index
    %93 = vector.load %arg7[%c2_61, %c0_62, %c0_63] : memref<3x32x32xbf16, #tpu.memory_space<vmem>>, vector<1x32x32xbf16>
    %94 = vector.shape_cast %93 : vector<1x32x32xbf16> to vector<32x32xbf16>
    %c2_64 = arith.constant 2 : index
    %c0_65 = arith.constant 0 : index
    %c0_66 = arith.constant 0 : index
    %95 = vector.load %arg8[%c2_64, %c0_65, %c0_66] : memref<3x32x1xf32, #tpu.memory_space<vmem>>, vector<1x32x1xf32>
    %96 = vector.shape_cast %95 : vector<1x32x1xf32> to vector<32x1xf32>
    %97 = arith.truncf %92 : vector<32x256xf32> to vector<32x256xbf16>
    %cst_67 = arith.constant dense<0.000000e+00> : vector<32x256xf32>
    %98 = tpu.matmul %94, %97, %cst_67 {dimension_numbers = #tpu.dot_dimension_numbers<[1], [0], [0], [1], [0, 0, 1, 1], [], []>} : vector<32x32xbf16>, vector<32x256xbf16>, vector<32x256xf32> -> vector<32x256xf32>
    %99 = vector.broadcast %96 : vector<32x1xf32> to vector<32x256xf32>
    %100 = arith.addf %98, %99 : vector<32x256xf32>
    %cst_68 = arith.constant 0.000000e+00 : f32
    %101 = vector.broadcast %cst_68 : f32 to vector<32x256xf32>
    %102 = arith.maximumf %100, %101 : vector<32x256xf32>
    %103 = arith.addf %92, %102 : vector<32x256xf32>
    %c0_69 = arith.constant 0 : index
    %c0_70 = arith.constant 0 : index
    %104 = vector.load %arg9[%c0_69, %c0_70] : memref<8x32xbf16, #tpu.memory_space<vmem>>, vector<8x32xbf16>
    %c0_71 = arith.constant 0 : index
    %c0_72 = arith.constant 0 : index
    %105 = vector.load %arg10[%c0_71, %c0_72] : memref<8x1xf32, #tpu.memory_space<vmem>>, vector<8x1xf32>
    %106 = arith.truncf %103 : vector<32x256xf32> to vector<32x256xbf16>
    %cst_73 = arith.constant dense<0.000000e+00> : vector<8x256xf32>
    %107 = tpu.matmul %104, %106, %cst_73 {dimension_numbers = #tpu.dot_dimension_numbers<[1], [0], [0], [1], [0, 0, 1, 1], [], []>} : vector<8x32xbf16>, vector<32x256xbf16>, vector<8x256xf32> -> vector<8x256xf32>
    %108 = vector.broadcast %105 : vector<8x1xf32> to vector<8x256xf32>
    %109 = arith.addf %107, %108 : vector<8x256xf32>
    %c0_74 = arith.constant 0 : index
    %c32 = arith.constant 32 : index
    %c0_75 = arith.constant 0 : index
    %110 = vector.load %arg11[%c0_74, %c32, %c0_75] : memref<1x40x256xf32, #tpu.memory_space<vmem>>, vector<1x8x256xf32>
    %111 = vector.shape_cast %110 : vector<1x8x256xf32> to vector<8x256xf32>
    %112 = vector.shape_cast %109 : vector<8x256xf32> to vector<1x8x256xf32>
    tpu.vector_store %arg11[%c0_74, %c32, %c0_75], %112 {strides = array<i32>} : memref<1x40x256xf32, #tpu.memory_space<vmem>>, vector<1x8x256xf32>,
    return
  }
  func.func @transform_0(%arg0: i32, %arg1: i32) -> (i32, i32, i32) {
    %c0_i32 = arith.constant 0 : i32
    %c0_i32_0 = arith.constant 0 : i32
    return %arg0, %c0_i32, %arg1 : i32, i32, i32
  }
  func.func @transform_1(%arg0: i32, %arg1: i32) -> (i32, i32) {
    %c0_i32 = arith.constant 0 : i32
    %c0_i32_0 = arith.constant 0 : i32
    %c0_i32_1 = arith.constant 0 : i32
    return %c0_i32, %c0_i32_0 : i32, i32
  }
  func.func @transform_2(%arg0: i32, %arg1: i32) -> (i32, i32) {
    %c0_i32 = arith.constant 0 : i32
    %c0_i32_0 = arith.constant 0 : i32
    %c0_i32_1 = arith.constant 0 : i32
    return %c0_i32, %c0_i32_0 : i32, i32
  }
  func.func @transform_3(%arg0: i32, %arg1: i32) -> (i32, i32, i32) {
    %c0_i32 = arith.constant 0 : i32
    %c0_i32_0 = arith.constant 0 : i32
    %c0_i32_1 = arith.constant 0 : i32
    %c0_i32_2 = arith.constant 0 : i32
    return %c0_i32, %c0_i32_0, %c0_i32_1 : i32, i32, i32
  }
  func.func @transform_4(%arg0: i32, %arg1: i32) -> (i32, i32, i32) {
    %c0_i32 = arith.constant 0 : i32
    %c0_i32_0 = arith.constant 0 : i32
    %c0_i32_1 = arith.constant 0 : i32
    %c0_i32_2 = arith.constant 0 : i32
    return %c0_i32, %c0_i32_0, %c0_i32_1 : i32, i32, i32
  }
  func.func @transform_5(%arg0: i32, %arg1: i32) -> (i32, i32, i32) {
    %c0_i32 = arith.constant 0 : i32
    %c0_i32_0 = arith.constant 0 : i32
    %c0_i32_1 = arith.constant 0 : i32
    %c0_i32_2 = arith.constant 0 : i32
    return %c0_i32, %c0_i32_0, %c0_i32_1 : i32, i32, i32
  }
  func.func @transform_6(%arg0: i32, %arg1: i32) -> (i32, i32, i32) {
    %c0_i32 = arith.constant 0 : i32
    %c0_i32_0 = arith.constant 0 : i32
    %c0_i32_1 = arith.constant 0 : i32
    %c0_i32_2 = arith.constant 0 : i32
    return %c0_i32, %c0_i32_0, %c0_i32_1 : i32, i32, i32
  }
  func.func @transform_7(%arg0: i32, %arg1: i32) -> (i32, i32) {
    %c0_i32 = arith.constant 0 : i32
    %c0_i32_0 = arith.constant 0 : i32
    %c0_i32_1 = arith.constant 0 : i32
    return %c0_i32, %c0_i32_0 : i32, i32
  }
  func.func @transform_8(%arg0: i32, %arg1: i32) -> (i32, i32) {
    %c0_i32 = arith.constant 0 : i32
    %c0_i32_0 = arith.constant 0 : i32
    %c0_i32_1 = arith.constant 0 : i32
    return %c0_i32, %c0_i32_0 : i32, i32
  }
  func.func @transform_9(%arg0: i32, %arg1: i32) -> (i32, i32, i32) {
    %c0_i32 = arith.constant 0 : i32
    %c0_i32_0 = arith.constant 0 : i32
    return %arg0, %c0_i32, %arg1 : i32, i32, i32
  }
}

</mosaic_0001>

<llo_original>
// kernel: derived_part_group_network_forward.1
$region0: #{derived_part_group_network_forward.1}
  #allocation0 [shape = 'u32[]', space=smem, size = 0x4, offset = 0x4, fixed_abs, tag = 'smem constant byte address 0x4 - core index']
  #allocation1 [shape = 'u32[144,128]{1,0:T(1,128)}', space=vmem, size = 0x12000, scoped, tag = 'internal scratch']
  %s0 = inlined_call_operand.vmem [shape: f32[2,4,256], index: 0, kind: input, shape index: {}]
  %s1 = inlined_call_operand.vmem [shape: bf16[32,4], index: 1, kind: input, shape index: {}]
  %s2 = inlined_call_operand.vmem [shape: f32[32,1], index: 2, kind: input, shape index: {}]
  %s3 = inlined_call_operand.vmem [shape: bf16[4,40,32], index: 3, kind: input, shape index: {}]
  %s4 = inlined_call_operand.vmem [shape: f32[4,40,1], index: 4, kind: input, shape index: {}]
  %s5 = inlined_call_operand.vmem [shape: bf16[3,32,32], index: 5, kind: input, shape index: {}]
  %s6 = inlined_call_operand.vmem [shape: f32[3,32,1], index: 6, kind: input, shape index: {}]
  %s7 = inlined_call_operand.vmem [shape: bf16[8,32], index: 7, kind: input, shape index: {}]
  %s8 = inlined_call_operand.vmem [shape: f32[8,1], index: 8, kind: input, shape index: {}]
  %s9 = inlined_call_operand.vmem [shape: f32[2,40,256], index: 9, kind: output, shape index: {}]
  %s10 = sld [smem:[#allocation0]]
  $region69: #{derived_part_group_network_forward.1} parent=0
    _
  %s12 = ssub.s32 1, %s10
  %s13 = scalar_select 0, %s12, %s10
  loop: start=0, step=1, limit=4
  $region2: #{derived_part_group_network_forward.1} parent=0 // loop_pre_header
    _
  $region3: #{derived_part_group_network_forward.1} parent=0 // loop_header
    %s15 = sphi 0, %s19
    %p16 = scmp.ge.s32.totalorder %s15, 4
    %s22 = sphi 0, %s34
    %s23 = sphi 0, %s30
    %s24 = sphi 0, %s22
    %s25 = sphi 0, %s23
    %s26 = sphi 0, %s24
    %s27 = sphi 0, %s25
    %s39 = sphi 0, %s41
    %s42 = sphi 0, %s39
    %s43 = sphi 0, %s42
    %s59 = sphi 0, %s43
    %s63 = sphi 0, %s63
    %s65 = sphi 0, %s63
    %s66 = sphi 0, %s65
    %s80 = sphi 0, %s66
    %s84 = sphi 0, %s84
    %s86 = sphi 0, %s84
    %s87 = sphi 0, %s86
    %s101 = sphi 0, %s87
    %s105 = sphi 0, %s105
    %s107 = sphi 0, %s105
    %s108 = sphi 0, %s107
    %s122 = sphi 0, %s108
    %s126 = sphi 0, %s126
    %s128 = sphi 0, %s126
    %s129 = sphi 0, %s128
    %s143 = sphi 0, %s129
    %s147 = sphi 0, %s147
    %s149 = sphi 0, %s147
    %s150 = sphi 0, %s149
    %s164 = sphi 0, %s150
    %s168 = sphi 0, %s168
    %s170 = sphi 0, %s168
    %s171 = sphi 0, %s170
    %s185 = sphi 0, %s171
    %s189 = sphi 0, %s189
    %s191 = sphi 0, %s189
    %s192 = sphi 0, %s191
    %s206 = sphi 0, %s192
    %s210 = sphi 0, %s210
    %s212 = sphi 0, %s210
    %s213 = sphi 0, %s212
    %s227 = sphi 0, %s213
    %s235 = sphi 0, %s237
    %s238 = sphi 0, %s235
    %s239 = sphi 0, %s238
    %s255 = sphi 0, %s239
  $region4: #{derived_part_group_network_forward.1} parent=0 // loop_header_branch
    %18 = sbr.rel (%p16) target = $region8
  $region5: #{derived_part_group_network_forward.1} parent=0 // loop_body
    %s20 = ssub.s32 %s15, 1
    %s21 = ssub.s32 %s15, 2
    %s28 = sadd.s32 1, %s23
    %p29 = scmp.ge.s32.totalorder %s28, 1
    %s30 = scalar_select %p29, 0, %s28
    %s31 = sadd.s32 1, %s22
    %s32 = scalar_select %p29, %s31, %s22
    %p33 = scmp.ge.s32.totalorder %s32, 2
    %s34 = scalar_select %p33, 0, %s32
    %s35 = ssub.s32 %s22, %s34
    %s36 = ssub.s32 %s23, %s30
    %s37 = sor.u32 %s35, %s36
    %p38 = scmp.eq.s32.totalorder %s37, 0
    %s40 = sadd.s32 %s39, 1
    %s41 = scalar_select %p38, %s39, %s40
    %p44 = pneg %p38
    %p45 = scmp.eq.s32.totalorder %s15, 1
    %p46 = por %p44, %p45
    %p47 = scmp.ne.s32.totalorder %s39, %s42
    %p48 = scmp.eq.s32.totalorder %s15, 0
    %p49 = por %p47, %p48
    %p50 = scmp.ne.s32.totalorder %s39, %s42
    %p51 = scmp.eq.s32.totalorder %s20, 1
    %p52 = por %p50, %p51
    %p53 = scmp.ne.s32.totalorder %s42, %s43
    %p54 = scmp.eq.s32.totalorder %s20, 0
    %p55 = por %p53, %p54
    %p56 = scmp.ne.s32.totalorder %s42, %s43
    %p57 = scmp.eq.s32.totalorder %s21, 1
    %p58 = por %p56, %p57
    %p60 = scmp.ne.s32.totalorder %s43, %s59
    %p61 = scmp.eq.s32.totalorder %s21, 0
    %p62 = por %p60, %p61
    %s64 = sadd.s32 %s63, 1
    %p67 = scmp.eq.s32.totalorder %s15, 1
    %p68 = scmp.ne.s32.totalorder %s63, %s65
    %p69 = scmp.eq.s32.totalorder %s15, 0
    %p70 = por %p68, %p69
    %p71 = scmp.ne.s32.totalorder %s63, %s65
    %p72 = scmp.eq.s32.totalorder %s20, 1
    %p73 = por %p71, %p72
    %p74 = scmp.ne.s32.totalorder %s65, %s66
    %p75 = scmp.eq.s32.totalorder %s20, 0
    %p76 = por %p74, %p75
    %p77 = scmp.ne.s32.totalorder %s65, %s66
    %p78 = scmp.eq.s32.totalorder %s21, 1
    %p79 = por %p77, %p78
    %p81 = scmp.ne.s32.totalorder %s66, %s80
    %p82 = scmp.eq.s32.totalorder %s21, 0
    %p83 = por %p81, %p82
    %s85 = sadd.s32 %s84, 1
    %p88 = scmp.eq.s32.totalorder %s15, 1
    %p89 = scmp.ne.s32.totalorder %s84, %s86
    %p90 = scmp.eq.s32.totalorder %s15, 0
    %p91 = por %p89, %p90
    %p92 = scmp.ne.s32.totalorder %s84, %s86
    %p93 = scmp.eq.s32.totalorder %s20, 1
    %p94 = por %p92, %p93
    %p95 = scmp.ne.s32.totalorder %s86, %s87
    %p96 = scmp.eq.s32.totalorder %s20, 0
    %p97 = por %p95, %p96
    %p98 = scmp.ne.s32.totalorder %s86, %s87
    %p99 = scmp.eq.s32.totalorder %s21, 1
    %p100 = por %p98, %p99
    %p102 = scmp.ne.s32.totalorder %s87, %s101
    %p103 = scmp.eq.s32.totalorder %s21, 0
    %p104 = por %p102, %p103
    %s106 = sadd.s32 %s105, 1
    %p109 = scmp.eq.s32.totalorder %s15, 1
    %p110 = scmp.ne.s32.totalorder %s105, %s107
    %p111 = scmp.eq.s32.totalorder %s15, 0
    %p112 = por %p110, %p111
    %p113 = scmp.ne.s32.totalorder %s105, %s107
    %p114 = scmp.eq.s32.totalorder %s20, 1
    %p115 = por %p113, %p114
    %p116 = scmp.ne.s32.totalorder %s107, %s108
    %p117 = scmp.eq.s32.totalorder %s20, 0
    %p118 = por %p116, %p117
    %p119 = scmp.ne.s32.totalorder %s107, %s108
    %p120 = scmp.eq.s32.totalorder %s21, 1
    %p121 = por %p119, %p120
    %p123 = scmp.ne.s32.totalorder %s108, %s122
    %p124 = scmp.eq.s32.totalorder %s21, 0
    %p125 = por %p123, %p124
    %s127 = sadd.s32 %s126, 1
    %p130 = scmp.eq.s32.totalorder %s15, 1
    %p131 = scmp.ne.s32.totalorder %s126, %s128
    %p132 = scmp.eq.s32.totalorder %s15, 0
    %p133 = por %p131, %p132
    %p134 = scmp.ne.s32.totalorder %s126, %s128
    %p135 = scmp.eq.s32.totalorder %s20, 1
    %p136 = por %p134, %p135
    %p137 = scmp.ne.s32.totalorder %s128, %s129
    %p138 = scmp.eq.s32.totalorder %s20, 0
    %p139 = por %p137, %p138
    %p140 = scmp.ne.s32.totalorder %s128, %s129
    %p141 = scmp.eq.s32.totalorder %s21, 1
    %p142 = por %p140, %p141
    %p144 = scmp.ne.s32.totalorder %s129, %s143
    %p145 = scmp.eq.s32.totalorder %s21, 0
    %p146 = por %p144, %p145
    %s148 = sadd.s32 %s147, 1
    %p151 = scmp.eq.s32.totalorder %s15, 1
    %p152 = scmp.ne.s32.totalorder %s147, %s149
    %p153 = scmp.eq.s32.totalorder %s15, 0
    %p154 = por %p152, %p153
    %p155 = scmp.ne.s32.totalorder %s147, %s149
    %p156 = scmp.eq.s32.totalorder %s20, 1
    %p157 = por %p155, %p156
    %p158 = scmp.ne.s32.totalorder %s149, %s150
    %p159 = scmp.eq.s32.totalorder %s20, 0
    %p160 = por %p158, %p159
    %p161 = scmp.ne.s32.totalorder %s149, %s150
    %p162 = scmp.eq.s32.totalorder %s21, 1
    %p163 = por %p161, %p162
    %p165 = scmp.ne.s32.totalorder %s150, %s164
    %p166 = scmp.eq.s32.totalorder %s21, 0
    %p167 = por %p165, %p166
    %s169 = sadd.s32 %s168, 1
    %p172 = scmp.eq.s32.totalorder %s15, 1
    %p173 = scmp.ne.s32.totalorder %s168, %s170
    %p174 = scmp.eq.s32.totalorder %s15, 0
    %p175 = por %p173, %p174
    %p176 = scmp.ne.s32.totalorder %s168, %s170
    %p177 = scmp.eq.s32.totalorder %s20, 1
    %p178 = por %p176, %p177
    %p179 = scmp.ne.s32.totalorder %s170, %s171
    %p180 = scmp.eq.s32.totalorder %s20, 0
    %p181 = por %p179, %p180
    %p182 = scmp.ne.s32.totalorder %s170, %s171
    %p183 = scmp.eq.s32.totalorder %s21, 1
    %p184 = por %p182, %p183
    %p186 = scmp.ne.s32.totalorder %s171, %s185
    %p187 = scmp.eq.s32.totalorder %s21, 0
    %p188 = por %p186, %p187
    %s190 = sadd.s32 %s189, 1
    %p193 = scmp.eq.s32.totalorder %s15, 1
    %p194 = scmp.ne.s32.totalorder %s189, %s191
    %p195 = scmp.eq.s32.totalorder %s15, 0
    %p196 = por %p194, %p195
    %p197 = scmp.ne.s32.totalorder %s189, %s191
    %p198 = scmp.eq.s32.totalorder %s20, 1
    %p199 = por %p197, %p198
    %p200 = scmp.ne.s32.totalorder %s191, %s192
    %p201 = scmp.eq.s32.totalorder %s20, 0
    %p202 = por %p200, %p201
    %p203 = scmp.ne.s32.totalorder %s191, %s192
    %p204 = scmp.eq.s32.totalorder %s21, 1
    %p205 = por %p203, %p204
    %p207 = scmp.ne.s32.totalorder %s192, %s206
    %p208 = scmp.eq.s32.totalorder %s21, 0
    %p209 = por %p207, %p208
    %s211 = sadd.s32 %s210, 1
    %p214 = scmp.eq.s32.totalorder %s15, 1
    %p215 = scmp.ne.s32.totalorder %s210, %s212
    %p216 = scmp.eq.s32.totalorder %s15, 0
    %p217 = por %p215, %p216
    %p218 = scmp.ne.s32.totalorder %s210, %s212
    %p219 = scmp.eq.s32.totalorder %s20, 1
    %p220 = por %p218, %p219
    %p221 = scmp.ne.s32.totalorder %s212, %s213
    %p222 = scmp.eq.s32.totalorder %s20, 0
    %p223 = por %p221, %p222
    %p224 = scmp.ne.s32.totalorder %s212, %s213
    %p225 = scmp.eq.s32.totalorder %s21, 1
    %p226 = por %p224, %p225
    %p228 = scmp.ne.s32.totalorder %s213, %s227
    %p229 = scmp.eq.s32.totalorder %s21, 0
    %p230 = por %p228, %p229
    %s231 = ssub.s32 %s22, %s34
    %s232 = ssub.s32 %s23, %s30
    %s233 = sor.u32 %s231, %s232
    %p234 = scmp.eq.s32.totalorder %s233, 0
    %s236 = sadd.s32 %s235, 1
    %s237 = scalar_select %p234, %s235, %s236
    %p240 = pneg %p234
    %p241 = scmp.eq.s32.totalorder %s15, 1
    %p242 = por %p240, %p241
    %p243 = scmp.ne.s32.totalorder %s235, %s238
    %p244 = scmp.eq.s32.totalorder %s15, 0
    %p245 = por %p243, %p244
    %p246 = scmp.ne.s32.totalorder %s235, %s238
    %p247 = scmp.eq.s32.totalorder %s20, 1
    %p248 = por %p246, %p247
    %p249 = scmp.ne.s32.totalorder %s238, %s239
    %p250 = scmp.eq.s32.totalorder %s20, 0
    %p251 = por %p249, %p250
    %p252 = scmp.ne.s32.totalorder %s238, %s239
    %p253 = scmp.eq.s32.totalorder %s21, 1
    %p254 = por %p252, %p253
    %p256 = scmp.ne.s32.totalorder %s239, %s255
    %p257 = scmp.eq.s32.totalorder %s21, 0
    %p258 = por %p256, %p257
    %p259 = scmp.le.s32.totalorder 1, %s15
    %p260 = scmp.lt.s32.totalorder %s15, 3
    %p261 = pnand %p259, %p260
    %p262 = pneg %p261
    // Predicated region
    $region9: #{derived_part_group_network_forward.1} parent=5 // pred_check
      _
    $region10: #{derived_part_group_network_forward.1} parent=5 // pred_check_branch
      %264 = sbr.rel (%p261) target = $region12
    $region11: #{derived_part_group_network_forward.1} parent=5 // pred_region
      %s265 = ssub.s32 %s15, 1
      // Predicated region
      $region13: #{derived_part_group_network_forward.1} parent=11 // pred_check
        %p266 = pneg %p76
      $region14: #{derived_part_group_network_forward.1} parent=11 // pred_check_branch
        %268 = sbr.rel (%p266) target = $region16
      $region15: #{derived_part_group_network_forward.1} parent=11 // pred_region
        _
      $region16: #{derived_part_group_network_forward.1} parent=11 // pred_fallthru
        _
      // Predicated region
      $region17: #{derived_part_group_network_forward.1} parent=11 // pred_check
        %p269 = pneg %p97
      $region18: #{derived_part_group_network_forward.1} parent=11 // pred_check_branch
        %271 = sbr.rel (%p269) target = $region20
      $region19: #{derived_part_group_network_forward.1} parent=11 // pred_region
        _
      $region20: #{derived_part_group_network_forward.1} parent=11 // pred_fallthru
        _
      // Predicated region
      $region21: #{derived_part_group_network_forward.1} parent=11 // pred_check
        %p272 = pneg %p118
      $region22: #{derived_part_group_network_forward.1} parent=11 // pred_check_branch
        %274 = sbr.rel (%p272) target = $region24
      $region23: #{derived_part_group_network_forward.1} parent=11 // pred_region
        _
      $region24: #{derived_part_group_network_forward.1} parent=11 // pred_fallthru
        _
      // Predicated region
      $region25: #{derived_part_group_network_forward.1} parent=11 // pred_check
        %p275 = pneg %p139
      $region26: #{derived_part_group_network_forward.1} parent=11 // pred_check_branch
        %277 = sbr.rel (%p275) target = $region28
      $region27: #{derived_part_group_network_forward.1} parent=11 // pred_region
        _
      $region28: #{derived_part_group_network_forward.1} parent=11 // pred_fallthru
        _
      // Predicated region
      $region29: #{derived_part_group_network_forward.1} parent=11 // pred_check
        %p278 = pneg %p160
      $region30: #{derived_part_group_network_forward.1} parent=11 // pred_check_branch
        %280 = sbr.rel (%p278) target = $region32
      $region31: #{derived_part_group_network_forward.1} parent=11 // pred_region
        _
      $region32: #{derived_part_group_network_forward.1} parent=11 // pred_fallthru
        _
      // Predicated region
      $region33: #{derived_part_group_network_forward.1} parent=11 // pred_check
        %p281 = pneg %p181
      $region34: #{derived_part_group_network_forward.1} parent=11 // pred_check_branch
        %283 = sbr.rel (%p281) target = $region36
      $region35: #{derived_part_group_network_forward.1} parent=11 // pred_region
        _
      $region36: #{derived_part_group_network_forward.1} parent=11 // pred_fallthru
        _
      // Predicated region
      $region37: #{derived_part_group_network_forward.1} parent=11 // pred_check
        %p284 = pneg %p202
      $region38: #{derived_part_group_network_forward.1} parent=11 // pred_check_branch
        %286 = sbr.rel (%p284) target = $region40
      $region39: #{derived_part_group_network_forward.1} parent=11 // pred_region
        _
      $region40: #{derived_part_group_network_forward.1} parent=11 // pred_fallthru
        _
      // Predicated region
      $region41: #{derived_part_group_network_forward.1} parent=11 // pred_check
        %p287 = pneg %p223
      $region42: #{derived_part_group_network_forward.1} parent=11 // pred_check_branch
        %289 = sbr.rel (%p287) target = $region44
      $region43: #{derived_part_group_network_forward.1} parent=11 // pred_region
        _
      $region44: #{derived_part_group_network_forward.1} parent=11 // pred_fallthru
        _
    $region12: #{derived_part_group_network_forward.1} parent=5 // pred_fallthru
      _
    %p290 = scmp.lt.s32.totalorder %s15, 2
    // Predicated region
    $region45: #{derived_part_group_network_forward.1} parent=5 // pred_check
      %p291 = pneg %p290
    $region46: #{derived_part_group_network_forward.1} parent=5 // pred_check_branch
      %293 = sbr.rel (%p291) target = $region48
    $region47: #{derived_part_group_network_forward.1} parent=5 // pred_region
      // Predicated region
      $region49: #{derived_part_group_network_forward.1} parent=47 // pred_check
        %p294 = pneg %p49
      $region50: #{derived_part_group_network_forward.1} parent=47 // pred_check_branch
        %296 = sbr.rel (%p294) target = $region52
      $region51: #{derived_part_group_network_forward.1} parent=47 // pred_region
        %s297 = smul.u32 2, %s23
        %p298 = scmp.lt.s32.totalorder %s22, 1
        %s299 = scalar_select %p298, %s22, 1
        %p300 = scmp.lt.s32.totalorder %s297, 1
        %s301 = scalar_select %p300, %s297, 1
        %s302 = smul.addr %s299, 2
        %s303 = sadd.s32 %s301, %s302
        %s304 = smul.addr %s303, 4
        %s305 = scalar_lea.vmem %s0, %s304
        %s306 = smul.u32 2, %s23
      $region52: #{derived_part_group_network_forward.1} parent=47 // pred_fallthru
        _
    $region48: #{derived_part_group_network_forward.1} parent=5 // pred_fallthru
      _
    %p307 = scmp.le.s32.totalorder 1, %s15
    %p308 = scmp.lt.s32.totalorder %s15, 3
    %p309 = pnand %p307, %p308
    %p310 = pneg %p309
    // Predicated region
    $region53: #{derived_part_group_network_forward.1} parent=5 // pred_check
      _
    $region54: #{derived_part_group_network_forward.1} parent=5 // pred_check_branch
      %312 = sbr.rel (%p309) target = $region56
    $region55: #{derived_part_group_network_forward.1} parent=5 // pred_region
      %s313 = ssub.s32 %s15, 1
      %s314 = smul.u32 2, %s25
      %p315 = scmp.lt.s32.totalorder %s24, 1
      %s316 = scalar_select %p315, %s24, 1
      %p317 = scmp.lt.s32.totalorder %s314, 1
      %s318 = scalar_select %p317, %s314, 1
      %s319 = smul.addr %s316, 2
      %s320 = sadd.s32 %s318, %s319
      %s321 = smul.addr %s320, 4
      %s322 = scalar_lea.vmem %s0, %s321
      %p323 = pneg %p55
      %p324 = pneg %p52
      %p325 = pneg %p76
      %p326 = pneg %p73
      %p327 = pneg %p97
      %p328 = pneg %p94
      %p329 = pneg %p118
      %p330 = pneg %p115
      %p331 = pneg %p139
      %p332 = pneg %p136
      %p333 = pneg %p160
      %p334 = pneg %p157
      %p335 = pneg %p181
      %p336 = pneg %p178
      %p337 = pneg %p202
      %p338 = pneg %p199
      %p339 = pneg %p223
      %p340 = pneg %p220
      %p341 = pneg %p251
      %p342 = pneg %p248
      %s343 = smul.u32 2, %s25
      %p344 = scmp.lt.s32.totalorder %s24, 1
      %s345 = scalar_select %p344, %s24, 1
      %p346 = scmp.lt.s32.totalorder %s343, 1
      %s347 = scalar_select %p346, %s343, 1
      %s348 = smul.addr %s345, 10
      %s349 = sadd.s32 %s347, %s348
      %s350 = smul.addr %s349, 8
      %s351 = scalar_lea.vmem %s9, %s350
      %s352 = smul.u32 2, %s25
      %p353 = scmp.lt.s32.totalorder %s24, 1
      %s354 = scalar_select %p353, %s24, 1
      %p355 = scmp.lt.s32.totalorder %s352, 1
      %s356 = scalar_select %p355, %s352, 1
      %s357 = smul.addr %s354, 2
      %s358 = sadd.s32 %s356, %s357
      %s359 = smul.addr %s358, 4
      %s360 = scalar_lea.vmem %s0, %s359
      %s361 = smul.u32 2, %s25
      %s362 = smul.u32 2, %s25
      %p363 = scmp.lt.s32.totalorder %s24, 1
      %s364 = scalar_select %p363, %s24, 1
      %p365 = scmp.lt.s32.totalorder %s362, 1
      %s366 = scalar_select %p365, %s362, 1
      %s367 = smul.addr %s364, 10
      %s368 = sadd.s32 %s366, %s367
      %s369 = smul.addr %s368, 8
      %s370 = scalar_lea.vmem %s9, %s369
      %s371 = smul.u32 2, %s25
      %v373 = vld [vmem:[%s360] sm:$0xff]
      %v374 = vld [vmem:[%s1] sm:$0xf]
      %v375 = vld [vmem:[%s1 + $0x4] sm:$0xf]
      %v376 = vld [vmem:[%s1 + $0x8] sm:$0xf]
      %v377 = vld [vmem:[%s1 + $0xc] sm:$0xf]
      %v378 = vld [vmem:[%s2] sm:$0xff]
      %v379 = vld [vmem:[%s2 + $0x8] sm:$0xff]
      %v380 = vld [vmem:[%s2 + $0x10] sm:$0xff]
      %v381 = vld [vmem:[%s2 + $0x18] sm:$0xff]
      %v383 = vcombine.high %v373, %v373
      %v385 = vpack.c.bf16 %v373, %v373
      %v386 = vpack.c.bf16 %v383, %v383
      %388 = vset.pattern.permute.xlu0 0
      %389 = vperm.xlu0 %388, %v378
      %v390 = vpop.permute.xlu0 %389
      %393 = vset.pattern.permute.xlu0 0
      %394 = vperm.xlu0 %393, %v379
      %v395 = vpop.permute.xlu0 %394
      %398 = vset.pattern.permute.xlu0 0
      %399 = vperm.xlu0 %398, %v380
      %v400 = vpop.permute.xlu0 %399
      %403 = vset.pattern.permute.xlu0 0
      %404 = vperm.xlu0 %403, %v381
      %v405 = vpop.permute.xlu0 %404
      %v411 = vunpack.c.l.b16 %v374
      %v412 = vunpack.c.l.b16 %v375
      %v413 = vunpack.c.l.b16 %v376
      %v414 = vunpack.c.l.b16 %v377
      %v415 = vpack.c.b16 %v412, %v411
      %v416 = vpack.c.b16 %v414, %v413
      %vm417 = vcmask 31744
      %v419 = vsel %vm417, %v415, 0
      %v422 = vsel %vm417, %v416, 0
      %vm424 = vcmask 1041408
      %v426 = vsel %vm424, %v385, 0
      %v429 = vsel %vm424, %v386, 0
      %431 = vmatprep.subr.bf16.mxu0 %v429
      %432 = vmatpush1.bf16.msra.mxu0 %v426
      %433 = vmatprep.subr.bf16.mxu0 0
      %434 = vmatpush1.bf16.msra.mxu0 0
      %435 = vmatprep.subr.bf16.mxu0 0
      %436 = vmatpush1.bf16.msra.mxu0 0
      %437 = vmatprep.subr.bf16.mxu0 0
      %438 = vmatpush1.bf16.msra.mxu0 0
      %439 = vmatprep.subr.bf16.mxu0 0
      %440 = vmatpush1.bf16.msra.mxu0 0
      %441 = vmatprep.subr.bf16.mxu0 0
      %442 = vmatpush1.bf16.msra.mxu0 0
      %443 = vmatprep.subr.bf16.mxu0 0
      %444 = vmatpush1.bf16.msra.mxu0 0
      %445 = vmatprep.subr.bf16.mxu0 0
      %446 = vmatpush1.bf16.msra.mxu0 0
      %447 = vmatprep.subr.bf16.mxu0 0
      %448 = vmatpush1.bf16.msra.mxu0 0
      %449 = vmatprep.subr.bf16.mxu0 0
      %450 = vmatpush1.bf16.msra.mxu0 0
      %451 = vmatprep.subr.bf16.mxu0 0
      %452 = vmatpush1.bf16.msra.mxu0 0
      %453 = vmatprep.subr.bf16.mxu0 0
      %454 = vmatpush1.bf16.msra.mxu0 0
      %455 = vmatprep.subr.bf16.mxu0 0
      %456 = vmatpush1.bf16.msra.mxu0 0
      %457 = vmatprep.subr.bf16.mxu0 0
      %458 = vmatpush1.bf16.msra.mxu0 0
      %459 = vmatprep.subr.bf16.mxu0 0
      %460 = vmatpush1.bf16.msra.mxu0 0
      %461 = vmatprep.subr.bf16.mxu0 0
      %462 = vmatpush1.bf16.msra.mxu0 0
      %463 = vmatprep.mubr.bf16.mxu0 0
      %464 = vmatmul.mubr.bf16.gmra.mrb[0].mxu0 %v419
      %v465 = vpop.f32.mrb[0].mxu0
      %v466 = vadd.f32 %v390, %v465
      %v467 = vpop.f32.mrb[0].mxu0
      %v468 = vadd.f32 %v390, %v467
      %v469 = vpop.f32.mrb[0].mxu0
      %v470 = vadd.f32 %v395, %v469
      %v471 = vpop.f32.mrb[0].mxu0
      %v472 = vadd.f32 %v395, %v471
      %473 = vmatprep.mubr.bf16.mxu0 0
      %474 = vmatmul.mubr.bf16.gmra.mrb[0].mxu0 %v422
      %v475 = vpop.f32.mrb[0].mxu0
      %v476 = vadd.f32 %v400, %v475
      %v477 = vpop.f32.mrb[0].mxu0
      %v478 = vadd.f32 %v400, %v477
      %v479 = vpop.f32.mrb[0].mxu0
      %v480 = vadd.f32 %v405, %v479
      %v481 = vpop.f32.mrb[0].mxu0
      %v482 = vadd.f32 %v405, %v481
      %483 = vdwg.mxu0
      %v484 = vmax.f32 %v466, 0.0
      %v485 = vmax.f32 %v468, 0.0
      %v486 = vmax.f32 %v470, 0.0
      %v487 = vmax.f32 %v472, 0.0
      %v488 = vmax.f32 %v476, 0.0
      %v489 = vmax.f32 %v478, 0.0
      %v490 = vmax.f32 %v480, 0.0
      %v491 = vmax.f32 %v482, 0.0
      %v492 = vld [vmem:[%s3] sm:$0xf]
      %v493 = vld [vmem:[%s3 + $0x4] sm:$0xf]
      %v494 = vld [vmem:[%s3 + $0x8] sm:$0xf]
      %v495 = vld [vmem:[%s3 + $0xc] sm:$0xf]
      %v496 = vld [vmem:[%s3 + $0x10] sm:$0xf]
      %v497 = vld [vmem:[%s4] sm:$0xff]
      %v498 = vld [vmem:[%s4 + $0x8] sm:$0xff]
      %v499 = vld [vmem:[%s4 + $0x10] sm:$0xff]
      %v500 = vld [vmem:[%s4 + $0x18] sm:$0xff]
      %v501 = vld [vmem:[%s4 + $0x20] sm:$0xff]
      %v502 = vpack.c.bf16 %v486, %v484
      %v503 = vpack.c.bf16 %v487, %v485
      %v504 = vpack.c.bf16 %v490, %v488
      %v505 = vpack.c.bf16 %v491, %v489
      %507 = vset.pattern.permute.xlu0 0
      %508 = vperm.xlu0 %507, %v497
      %v509 = vpop.permute.xlu0 %508
      %512 = vset.pattern.permute.xlu0 0
      %513 = vperm.xlu0 %512, %v498
      %v514 = vpop.permute.xlu0 %513
      %517 = vset.pattern.permute.xlu0 0
      %518 = vperm.xlu0 %517, %v499
      %v519 = vpop.permute.xlu0 %518
      %522 = vset.pattern.permute.xlu0 0
      %523 = vperm.xlu0 %522, %v500
      %v524 = vpop.permute.xlu0 %523
      %527 = vset.pattern.permute.xlu0 0
      %528 = vperm.xlu0 %527, %v501
      %v529 = vpop.permute.xlu0 %528
      %v536 = vunpack.c.l.b16 %v492
      %v537 = vunpack.c.l.b16 %v493
      %v538 = vunpack.c.l.b16 %v494
      %v539 = vunpack.c.l.b16 %v495
      %v540 = vunpack.c.l.b16 %v496
      %v541 = vpack.c.b16 %v537, %v536
      %v542 = vpack.c.b16 %v539, %v538
      %v543 = vpack.c.b16 %v540, %v540
      %vm544 = vcmask 261120
      %v546 = vsel %vm544, %v541, 0
      %v549 = vsel %vm544, %v542, 0
      %v552 = vsel %vm544, %v543, 0
      %554 = vmatprep.subr.bf16.mxu0 %v503
      %555 = vmatpush1.bf16.msra.mxu0 %v502
      %556 = vmatprep.subr.bf16.mxu0 %v505
      %557 = vmatpush1.bf16.msra.mxu0 %v504
      %558 = vmatprep.subr.bf16.mxu0 0
      %559 = vmatpush1.bf16.msra.mxu0 0
      %560 = vmatprep.subr.bf16.mxu0 0
      %561 = vmatpush1.bf16.msra.mxu0 0
      %562 = vmatprep.subr.bf16.mxu0 0
      %563 = vmatpush1.bf16.msra.mxu0 0
      %564 = vmatprep.subr.bf16.mxu0 0
      %565 = vmatpush1.bf16.msra.mxu0 0
      %566 = vmatprep.subr.bf16.mxu0 0
      %567 = vmatpush1.bf16.msra.mxu0 0
      %568 = vmatprep.subr.bf16.mxu0 0
      %569 = vmatpush1.bf16.msra.mxu0 0
      %570 = vmatprep.subr.bf16.mxu0 0
      %571 = vmatpush1.bf16.msra.mxu0 0
      %572 = vmatprep.subr.bf16.mxu0 0
      %573 = vmatpush1.bf16.msra.mxu0 0
      %574 = vmatprep.subr.bf16.mxu0 0
      %575 = vmatpush1.bf16.msra.mxu0 0
      %576 = vmatprep.subr.bf16.mxu0 0
      %577 = vmatpush1.bf16.msra.mxu0 0
      %578 = vmatprep.subr.bf16.mxu0 0
      %579 = vmatpush1.bf16.msra.mxu0 0
      %580 = vmatprep.subr.bf16.mxu0 0
      %581 = vmatpush1.bf16.msra.mxu0 0
      %582 = vmatprep.subr.bf16.mxu0 0
      %583 = vmatpush1.bf16.msra.mxu0 0
      %584 = vmatprep.subr.bf16.mxu0 0
      %585 = vmatpush1.bf16.msra.mxu0 0
      %586 = vmatprep.mubr.bf16.mxu0 0
      %587 = vmatmul.mubr.bf16.gmra.mrb[0].mxu0 %v546
      %v588 = vpop.f32.mrb[0].mxu0
      %v589 = vadd.f32 %v509, %v588
      %v590 = vpop.f32.mrb[0].mxu0
      %v591 = vadd.f32 %v509, %v590
      %v592 = vpop.f32.mrb[0].mxu0
      %v593 = vadd.f32 %v514, %v592
      %v594 = vpop.f32.mrb[0].mxu0
      %v595 = vadd.f32 %v514, %v594
      %596 = vmatprep.mubr.bf16.mxu0 0
      %597 = vmatmul.mubr.bf16.gmra.mrb[0].mxu0 %v549
      %v598 = vpop.f32.mrb[0].mxu0
      %v599 = vadd.f32 %v519, %v598
      %v600 = vpop.f32.mrb[0].mxu0
      %v601 = vadd.f32 %v519, %v600
      %v602 = vpop.f32.mrb[0].mxu0
      %v603 = vadd.f32 %v524, %v602
      %v604 = vpop.f32.mrb[0].mxu0
      %v605 = vadd.f32 %v524, %v604
      %606 = vmatprep.mubr.bf16.mxu0 0
      %607 = vmatmul.mubr.bf16.gmra.mrb[0].mxu0 %v552
      %v608 = vpop.f32.mrb[0].mxu0
      %v609 = vadd.f32 %v529, %v608
      %v610 = vpop.f32.mrb[0].mxu0
      %v611 = vadd.f32 %v529, %v610
      %v612 = vpop.f32.mrb[0].mxu0
      %v613 = vpop.f32.mrb[0].mxu0
      %614 = vdwg.mxu0
      %615 = vst [vmem:[%s370] sm:$0xff] %v589
      %616 = vst [vmem:[%s370 + $0x8] sm:$0xff] %v591
      %v617 = vmax.f32 %v593, 0.0
      %v618 = vmax.f32 %v595, 0.0
      %v619 = vmax.f32 %v599, 0.0
      %v620 = vmax.f32 %v601, 0.0
      %v621 = vmax.f32 %v603, 0.0
      %v622 = vmax.f32 %v605, 0.0
      %v623 = vmax.f32 %v609, 0.0
      %v624 = vmax.f32 %v611, 0.0
      %v625 = vadd.f32 %v484, %v617
      %v626 = vadd.f32 %v485, %v618
      %v627 = vadd.f32 %v486, %v619
      %v628 = vadd.f32 %v487, %v620
      %v629 = vadd.f32 %v488, %v621
      %v630 = vadd.f32 %v489, %v622
      %v631 = vadd.f32 %v490, %v623
      %v632 = vadd.f32 %v491, %v624
      %s633 = scalar_lea.vmem %s3, 20
      %v634 = vld [vmem:[%s633] sm:$0xf]
      %v635 = vld [vmem:[%s633 + $0x4] sm:$0xf]
      %v636 = vld [vmem:[%s633 + $0x8] sm:$0xf]
      %v637 = vld [vmem:[%s633 + $0xc] sm:$0xf]
      %v638 = vld [vmem:[%s633 + $0x10] sm:$0xf]
      %s639 = scalar_lea.vmem %s4, 40
      %v640 = vld [vmem:[%s639] sm:$0xff]
      %v641 = vld [vmem:[%s639 + $0x8] sm:$0xff]
      %v642 = vld [vmem:[%s639 + $0x10] sm:$0xff]
      %v643 = vld [vmem:[%s639 + $0x18] sm:$0xff]
      %v644 = vld [vmem:[%s639 + $0x20] sm:$0xff]
      %v645 = vpack.c.bf16 %v627, %v625
      %v646 = vpack.c.bf16 %v628, %v626
      %v647 = vpack.c.bf16 %v631, %v629
      %v648 = vpack.c.bf16 %v632, %v630
      %650 = vset.pattern.permute.xlu0 0
      %651 = vperm.xlu0 %650, %v640
      %v652 = vpop.permute.xlu0 %651
      %655 = vset.pattern.permute.xlu0 0
      %656 = vperm.xlu0 %655, %v641
      %v657 = vpop.permute.xlu0 %656
      %660 = vset.pattern.permute.xlu0 0
      %661 = vperm.xlu0 %660, %v642
      %v662 = vpop.permute.xlu0 %661
      %665 = vset.pattern.permute.xlu0 0
      %666 = vperm.xlu0 %665, %v643
      %v667 = vpop.permute.xlu0 %666
      %670 = vset.pattern.permute.xlu0 0
      %671 = vperm.xlu0 %670, %v644
      %v672 = vpop.permute.xlu0 %671
      %v679 = vunpack.c.l.b16 %v634
      %v680 = vunpack.c.l.b16 %v635
      %v681 = vunpack.c.l.b16 %v636
      %v682 = vunpack.c.l.b16 %v637
      %v683 = vunpack.c.l.b16 %v638
      %v684 = vpack.c.b16 %v680, %v679
      %v685 = vpack.c.b16 %v682, %v681
      %v686 = vpack.c.b16 %v683, %v683
      %v688 = vsel %vm544, %v684, 0
      %v691 = vsel %vm544, %v685, 0
      %v694 = vsel %vm544, %v686, 0
      %696 = vmatprep.subr.bf16.mxu0 %v646
      %697 = vmatpush1.bf16.msra.mxu0 %v645
      %698 = vmatprep.subr.bf16.mxu0 %v648
      %699 = vmatpush1.bf16.msra.mxu0 %v647
      %700 = vmatprep.subr.bf16.mxu0 0
      %701 = vmatpush1.bf16.msra.mxu0 0
      %702 = vmatprep.subr.bf16.mxu0 0
      %703 = vmatpush1.bf16.msra.mxu0 0
      %704 = vmatprep.subr.bf16.mxu0 0
      %705 = vmatpush1.bf16.msra.mxu0 0
      %706 = vmatprep.subr.bf16.mxu0 0
      %707 = vmatpush1.bf16.msra.mxu0 0
      %708 = vmatprep.subr.bf16.mxu0 0
      %709 = vmatpush1.bf16.msra.mxu0 0
      %710 = vmatprep.subr.bf16.mxu0 0
      %711 = vmatpush1.bf16.msra.mxu0 0
      %712 = vmatprep.subr.bf16.mxu0 0
      %713 = vmatpush1.bf16.msra.mxu0 0
      %714 = vmatprep.subr.bf16.mxu0 0
      %715 = vmatpush1.bf16.msra.mxu0 0
      %716 = vmatprep.subr.bf16.mxu0 0
      %717 = vmatpush1.bf16.msra.mxu0 0
      %718 = vmatprep.subr.bf16.mxu0 0
      %719 = vmatpush1.bf16.msra.mxu0 0
      %720 = vmatprep.subr.bf16.mxu0 0
      %721 = vmatpush1.bf16.msra.mxu0 0
      %722 = vmatprep.subr.bf16.mxu0 0
      %723 = vmatpush1.bf16.msra.mxu0 0
      %724 = vmatprep.subr.bf16.mxu0 0
      %725 = vmatpush1.bf16.msra.mxu0 0
      %726 = vmatprep.subr.bf16.mxu0 0
      %727 = vmatpush1.bf16.msra.mxu0 0
      %728 = vmatprep.mubr.bf16.mxu0 0
      %729 = vmatmul.mubr.bf16.gmra.mrb[0].mxu0 %v688
      %v730 = vpop.f32.mrb[0].mxu0
      %v731 = vadd.f32 %v652, %v730
      %v732 = vpop.f32.mrb[0].mxu0
      %v733 = vadd.f32 %v652, %v732
      %v734 = vpop.f32.mrb[0].mxu0
      %v735 = vadd.f32 %v657, %v734
      %v736 = vpop.f32.mrb[0].mxu0
      %v737 = vadd.f32 %v657, %v736
      %738 = vmatprep.mubr.bf16.mxu0 0
      %739 = vmatmul.mubr.bf16.gmra.mrb[0].mxu0 %v691
      %v740 = vpop.f32.mrb[0].mxu0
      %v741 = vadd.f32 %v662, %v740
      %v742 = vpop.f32.mrb[0].mxu0
      %v743 = vadd.f32 %v662, %v742
      %v744 = vpop.f32.mrb[0].mxu0
      %v745 = vadd.f32 %v667, %v744
      %v746 = vpop.f32.mrb[0].mxu0
      %v747 = vadd.f32 %v667, %v746
      %748 = vmatprep.mubr.bf16.mxu0 0
      %749 = vmatmul.mubr.bf16.gmra.mrb[0].mxu0 %v694
      %v750 = vpop.f32.mrb[0].mxu0
      %v751 = vadd.f32 %v672, %v750
      %v752 = vpop.f32.mrb[0].mxu0
      %v753 = vadd.f32 %v672, %v752
      %v754 = vpop.f32.mrb[0].mxu0
      %v755 = vpop.f32.mrb[0].mxu0
      %756 = vdwg.mxu0
      %757 = vst [vmem:[%s370 + $0x10] sm:$0xff] %v731
      %758 = vst [vmem:[%s370 + $0x18] sm:$0xff] %v733
      %v759 = vmax.f32 %v735, 0.0
      %v760 = vmax.f32 %v737, 0.0
      %v761 = vmax.f32 %v741, 0.0
      %v762 = vmax.f32 %v743, 0.0
      %v763 = vmax.f32 %v745, 0.0
      %v764 = vmax.f32 %v747, 0.0
      %v765 = vmax.f32 %v751, 0.0
      %v766 = vmax.f32 %v753, 0.0
      %v767 = vld [vmem:[%s5] sm:$0xf]
      %v768 = vld [vmem:[%s5 + $0x4] sm:$0xf]
      %v769 = vld [vmem:[%s5 + $0x8] sm:$0xf]
      %v770 = vld [vmem:[%s5 + $0xc] sm:$0xf]
      %v771 = vld [vmem:[%s6] sm:$0xff]
      %v772 = vld [vmem:[%s6 + $0x8] sm:$0xff]
      %v773 = vld [vmem:[%s6 + $0x10] sm:$0xff]
      %v774 = vld [vmem:[%s6 + $0x18] sm:$0xff]
      %v775 = vpack.c.bf16 %v761, %v759
      %v776 = vpack.c.bf16 %v762, %v760
      %v777 = vpack.c.bf16 %v765, %v763
      %v778 = vpack.c.bf16 %v766, %v764
      %780 = vset.pattern.permute.xlu0 0
      %781 = vperm.xlu0 %780, %v771
      %v782 = vpop.permute.xlu0 %781
      %785 = vset.pattern.permute.xlu0 0
      %786 = vperm.xlu0 %785, %v772
      %v787 = vpop.permute.xlu0 %786
      %790 = vset.pattern.permute.xlu0 0
      %791 = vperm.xlu0 %790, %v773
      %v792 = vpop.permute.xlu0 %791
      %795 = vset.pattern.permute.xlu0 0
      %796 = vperm.xlu0 %795, %v774
      %v797 = vpop.permute.xlu0 %796
      %v803 = vunpack.c.l.b16 %v767
      %v804 = vunpack.c.l.b16 %v768
      %v805 = vunpack.c.l.b16 %v769
      %v806 = vunpack.c.l.b16 %v770
      %v807 = vpack.c.b16 %v804, %v803
      %v808 = vpack.c.b16 %v806, %v805
      %v810 = vsel %vm544, %v807, 0
      %v813 = vsel %vm544, %v808, 0
      %815 = vmatprep.subr.bf16.mxu0 %v776
      %816 = vmatpush1.bf16.msra.mxu0 %v775
      %817 = vmatprep.subr.bf16.mxu0 %v778
      %818 = vmatpush1.bf16.msra.mxu0 %v777
      %819 = vmatprep.subr.bf16.mxu0 0
      %820 = vmatpush1.bf16.msra.mxu0 0
      %821 = vmatprep.subr.bf16.mxu0 0
      %822 = vmatpush1.bf16.msra.mxu0 0
      %823 = vmatprep.subr.bf16.mxu0 0
      %824 = vmatpush1.bf16.msra.mxu0 0
      %825 = vmatprep.subr.bf16.mxu0 0
      %826 = vmatpush1.bf16.msra.mxu0 0
      %827 = vmatprep.subr.bf16.mxu0 0
      %828 = vmatpush1.bf16.msra.mxu0 0
      %829 = vmatprep.subr.bf16.mxu0 0
      %830 = vmatpush1.bf16.msra.mxu0 0
      %831 = vmatprep.subr.bf16.mxu0 0
      %832 = vmatpush1.bf16.msra.mxu0 0
      %833 = vmatprep.subr.bf16.mxu0 0
      %834 = vmatpush1.bf16.msra.mxu0 0
      %835 = vmatprep.subr.bf16.mxu0 0
      %836 = vmatpush1.bf16.msra.mxu0 0
      %837 = vmatprep.subr.bf16.mxu0 0
      %838 = vmatpush1.bf16.msra.mxu0 0
      %839 = vmatprep.subr.bf16.mxu0 0
      %840 = vmatpush1.bf16.msra.mxu0 0
      %841 = vmatprep.subr.bf16.mxu0 0
      %842 = vmatpush1.bf16.msra.mxu0 0
      %843 = vmatprep.subr.bf16.mxu0 0
      %844 = vmatpush1.bf16.msra.mxu0 0
      %845 = vmatprep.subr.bf16.mxu0 0
      %846 = vmatpush1.bf16.msra.mxu0 0
      %847 = vmatprep.mubr.bf16.mxu0 0
      %848 = vmatmul.mubr.bf16.gmra.mrb[0].mxu0 %v810
      %v849 = vpop.f32.mrb[0].mxu0
      %v850 = vadd.f32 %v782, %v849
      %v851 = vpop.f32.mrb[0].mxu0
      %v852 = vadd.f32 %v782, %v851
      %v853 = vpop.f32.mrb[0].mxu0
      %v854 = vadd.f32 %v787, %v853
      %v855 = vpop.f32.mrb[0].mxu0
      %v856 = vadd.f32 %v787, %v855
      %857 = vmatprep.mubr.bf16.mxu0 0
      %858 = vmatmul.mubr.bf16.gmra.mrb[0].mxu0 %v813
      %v859 = vpop.f32.mrb[0].mxu0
      %v860 = vadd.f32 %v792, %v859
      %v861 = vpop.f32.mrb[0].mxu0
      %v862 = vadd.f32 %v792, %v861
      %v863 = vpop.f32.mrb[0].mxu0
      %v864 = vadd.f32 %v797, %v863
      %v865 = vpop.f32.mrb[0].mxu0
      %v866 = vadd.f32 %v797, %v865
      %867 = vdwg.mxu0
      %v868 = vmax.f32 %v850, 0.0
      %v869 = vmax.f32 %v852, 0.0
      %v870 = vmax.f32 %v854, 0.0
      %v871 = vmax.f32 %v856, 0.0
      %v872 = vmax.f32 %v860, 0.0
      %v873 = vmax.f32 %v862, 0.0
      %v874 = vmax.f32 %v864, 0.0
      %v875 = vmax.f32 %v866, 0.0
      %v876 = vadd.f32 %v759, %v868
      %v877 = vadd.f32 %v760, %v869
      %v878 = vadd.f32 %v761, %v870
      %v879 = vadd.f32 %v762, %v871
      %v880 = vadd.f32 %v763, %v872
      %v881 = vadd.f32 %v764, %v873
      %v882 = vadd.f32 %v765, %v874
      %v883 = vadd.f32 %v766, %v875
      %s884 = scalar_lea.vmem %s3, 40
      %v885 = vld [vmem:[%s884] sm:$0xf]
      %v886 = vld [vmem:[%s884 + $0x4] sm:$0xf]
      %v887 = vld [vmem:[%s884 + $0x8] sm:$0xf]
      %v888 = vld [vmem:[%s884 + $0xc] sm:$0xf]
      %v889 = vld [vmem:[%s884 + $0x10] sm:$0xf]
      %s890 = scalar_lea.vmem %s4, 80
      %v891 = vld [vmem:[%s890] sm:$0xff]
      %v892 = vld [vmem:[%s890 + $0x8] sm:$0xff]
      %v893 = vld [vmem:[%s890 + $0x10] sm:$0xff]
      %v894 = vld [vmem:[%s890 + $0x18] sm:$0xff]
      %v895 = vld [vmem:[%s890 + $0x20] sm:$0xff]
      %v896 = vpack.c.bf16 %v878, %v876
      %v897 = vpack.c.bf16 %v879, %v877
      %v898 = vpack.c.bf16 %v882, %v880
      %v899 = vpack.c.bf16 %v883, %v881
      %901 = vset.pattern.permute.xlu0 0
      %902 = vperm.xlu0 %901, %v891
      %v903 = vpop.permute.xlu0 %902
      %906 = vset.pattern.permute.xlu0 0
      %907 = vperm.xlu0 %906, %v892
      %v908 = vpop.permute.xlu0 %907
      %911 = vset.pattern.permute.xlu0 0
      %912 = vperm.xlu0 %911, %v893
      %v913 = vpop.permute.xlu0 %912
      %916 = vset.pattern.permute.xlu0 0
      %917 = vperm.xlu0 %916, %v894
      %v918 = vpop.permute.xlu0 %917
      %921 = vset.pattern.permute.xlu0 0
      %922 = vperm.xlu0 %921, %v895
      %v923 = vpop.permute.xlu0 %922
      %v930 = vunpack.c.l.b16 %v885
      %v931 = vunpack.c.l.b16 %v886
      %v932 = vunpack.c.l.b16 %v887
      %v933 = vunpack.c.l.b16 %v888
      %v934 = vunpack.c.l.b16 %v889
      %v935 = vpack.c.b16 %v931, %v930
      %v936 = vpack.c.b16 %v933, %v932
      %v937 = vpack.c.b16 %v934, %v934
      %v939 = vsel %vm544, %v935, 0
      %v942 = vsel %vm544, %v936, 0
      %v945 = vsel %vm544, %v937, 0
      %947 = vmatprep.subr.bf16.mxu0 %v897
      %948 = vmatpush1.bf16.msra.mxu0 %v896
      %949 = vmatprep.subr.bf16.mxu0 %v899
      %950 = vmatpush1.bf16.msra.mxu0 %v898
      %951 = vmatprep.subr.bf16.mxu0 0
      %952 = vmatpush1.bf16.msra.mxu0 0
      %953 = vmatprep.subr.bf16.mxu0 0
      %954 = vmatpush1.bf16.msra.mxu0 0
      %955 = vmatprep.subr.bf16.mxu0 0
      %956 = vmatpush1.bf16.msra.mxu0 0
      %957 = vmatprep.subr.bf16.mxu0 0
      %958 = vmatpush1.bf16.msra.mxu0 0
      %959 = vmatprep.subr.bf16.mxu0 0
      %960 = vmatpush1.bf16.msra.mxu0 0
      %961 = vmatprep.subr.bf16.mxu0 0
      %962 = vmatpush1.bf16.msra.mxu0 0
      %963 = vmatprep.subr.bf16.mxu0 0
      %964 = vmatpush1.bf16.msra.mxu0 0
      %965 = vmatprep.subr.bf16.mxu0 0
      %966 = vmatpush1.bf16.msra.mxu0 0
      %967 = vmatprep.subr.bf16.mxu0 0
      %968 = vmatpush1.bf16.msra.mxu0 0
      %969 = vmatprep.subr.bf16.mxu0 0
      %970 = vmatpush1.bf16.msra.mxu0 0
      %971 = vmatprep.subr.bf16.mxu0 0
      %972 = vmatpush1.bf16.msra.mxu0 0
      %973 = vmatprep.subr.bf16.mxu0 0
      %974 = vmatpush1.bf16.msra.mxu0 0
      %975 = vmatprep.subr.bf16.mxu0 0
      %976 = vmatpush1.bf16.msra.mxu0 0
      %977 = vmatprep.subr.bf16.mxu0 0
      %978 = vmatpush1.bf16.msra.mxu0 0
      %979 = vmatprep.mubr.bf16.mxu0 0
      %980 = vmatmul.mubr.bf16.gmra.mrb[0].mxu0 %v939
      %v981 = vpop.f32.mrb[0].mxu0
      %v982 = vadd.f32 %v903, %v981
      %v983 = vpop.f32.mrb[0].mxu0
      %v984 = vadd.f32 %v903, %v983
      %v985 = vpop.f32.mrb[0].mxu0
      %v986 = vadd.f32 %v908, %v985
      %v987 = vpop.f32.mrb[0].mxu0
      %v988 = vadd.f32 %v908, %v987
      %989 = vmatprep.mubr.bf16.mxu0 0
      %990 = vmatmul.mubr.bf16.gmra.mrb[0].mxu0 %v942
      %v991 = vpop.f32.mrb[0].mxu0
      %v992 = vadd.f32 %v913, %v991
      %v993 = vpop.f32.mrb[0].mxu0
      %v994 = vadd.f32 %v913, %v993
      %v995 = vpop.f32.mrb[0].mxu0
      %v996 = vadd.f32 %v918, %v995
      %v997 = vpop.f32.mrb[0].mxu0
      %v998 = vadd.f32 %v918, %v997
      %999 = vmatprep.mubr.bf16.mxu0 0
      %1000 = vmatmul.mubr.bf16.gmra.mrb[0].mxu0 %v945
      %v1001 = vpop.f32.mrb[0].mxu0
      %v1002 = vadd.f32 %v923, %v1001
      %v1003 = vpop.f32.mrb[0].mxu0
      %v1004 = vadd.f32 %v923, %v1003
      %v1005 = vpop.f32.mrb[0].mxu0
      %v1006 = vpop.f32.mrb[0].mxu0
      %1007 = vdwg.mxu0
      %1008 = vst [vmem:[%s370 + $0x20] sm:$0xff] %v982
      %1009 = vst [vmem:[%s370 + $0x28] sm:$0xff] %v984
      %v1010 = vmax.f32 %v986, 0.0
      %v1011 = vmax.f32 %v988, 0.0
      %v1012 = vmax.f32 %v992, 0.0
      %v1013 = vmax.f32 %v994, 0.0
      %v1014 = vmax.f32 %v996, 0.0
      %v1015 = vmax.f32 %v998, 0.0
      %v1016 = vmax.f32 %v1002, 0.0
      %v1017 = vmax.f32 %v1004, 0.0
      %s1018 = scalar_lea.vmem %s5, 16
      %v1019 = vld [vmem:[%s1018] sm:$0xf]
      %v1020 = vld [vmem:[%s1018 + $0x4] sm:$0xf]
      %v1021 = vld [vmem:[%s1018 + $0x8] sm:$0xf]
      %v1022 = vld [vmem:[%s1018 + $0xc] sm:$0xf]
      %s1023 = scalar_lea.vmem %s6, 32
      %v1024 = vld [vmem:[%s1023] sm:$0xff]
      %v1025 = vld [vmem:[%s1023 + $0x8] sm:$0xff]
      %v1026 = vld [vmem:[%s1023 + $0x10] sm:$0xff]
      %v1027 = vld [vmem:[%s1023 + $0x18] sm:$0xff]
      %v1028 = vpack.c.bf16 %v1012, %v1010
      %v1029 = vpack.c.bf16 %v1013, %v1011
      %v1030 = vpack.c.bf16 %v1016, %v1014
      %v1031 = vpack.c.bf16 %v1017, %v1015
      %1033 = vset.pattern.permute.xlu0 0
      %1034 = vperm.xlu0 %1033, %v1024
      %v1035 = vpop.permute.xlu0 %1034
      %1038 = vset.pattern.permute.xlu0 0
      %1039 = vperm.xlu0 %1038, %v1025
      %v1040 = vpop.permute.xlu0 %1039
      %1043 = vset.pattern.permute.xlu0 0
      %1044 = vperm.xlu0 %1043, %v1026
      %v1045 = vpop.permute.xlu0 %1044
      %1048 = vset.pattern.permute.xlu0 0
      %1049 = vperm.xlu0 %1048, %v1027
      %v1050 = vpop.permute.xlu0 %1049
      %v1056 = vunpack.c.l.b16 %v1019
      %v1057 = vunpack.c.l.b16 %v1020
      %v1058 = vunpack.c.l.b16 %v1021
      %v1059 = vunpack.c.l.b16 %v1022
      %v1060 = vpack.c.b16 %v1057, %v1056
      %v1061 = vpack.c.b16 %v1059, %v1058
      %v1063 = vsel %vm544, %v1060, 0
      %v1066 = vsel %vm544, %v1061, 0
      %1068 = vmatprep.subr.bf16.mxu0 %v1029
      %1069 = vmatpush1.bf16.msra.mxu0 %v1028
      %1070 = vmatprep.subr.bf16.mxu0 %v1031
      %1071 = vmatpush1.bf16.msra.mxu0 %v1030
      %1072 = vmatprep.subr.bf16.mxu0 0
      %1073 = vmatpush1.bf16.msra.mxu0 0
      %1074 = vmatprep.subr.bf16.mxu0 0
      %1075 = vmatpush1.bf16.msra.mxu0 0
      %1076 = vmatprep.subr.bf16.mxu0 0
      %1077 = vmatpush1.bf16.msra.mxu0 0
      %1078 = vmatprep.subr.bf16.mxu0 0
      %1079 = vmatpush1.bf16.msra.mxu0 0
      %1080 = vmatprep.subr.bf16.mxu0 0
      %1081 = vmatpush1.bf16.msra.mxu0 0
      %1082 = vmatprep.subr.bf16.mxu0 0
      %1083 = vmatpush1.bf16.msra.mxu0 0
      %1084 = vmatprep.subr.bf16.mxu0 0
      %1085 = vmatpush1.bf16.msra.mxu0 0
      %1086 = vmatprep.subr.bf16.mxu0 0
      %1087 = vmatpush1.bf16.msra.mxu0 0
      %1088 = vmatprep.subr.bf16.mxu0 0
      %1089 = vmatpush1.bf16.msra.mxu0 0
      %1090 = vmatprep.subr.bf16.mxu0 0
      %1091 = vmatpush1.bf16.msra.mxu0 0
      %1092 = vmatprep.subr.bf16.mxu0 0
      %1093 = vmatpush1.bf16.msra.mxu0 0
      %1094 = vmatprep.subr.bf16.mxu0 0
      %1095 = vmatpush1.bf16.msra.mxu0 0
      %1096 = vmatprep.subr.bf16.mxu0 0
      %1097 = vmatpush1.bf16.msra.mxu0 0
      %1098 = vmatprep.subr.bf16.mxu0 0
      %1099 = vmatpush1.bf16.msra.mxu0 0
      %1100 = vmatprep.mubr.bf16.mxu0 0
      %1101 = vmatmul.mubr.bf16.gmra.mrb[0].mxu0 %v1063
      %v1102 = vpop.f32.mrb[0].mxu0
      %v1103 = vadd.f32 %v1035, %v1102
      %v1104 = vpop.f32.mrb[0].mxu0
      %v1105 = vadd.f32 %v1035, %v1104
      %v1106 = vpop.f32.mrb[0].mxu0
      %v1107 = vadd.f32 %v1040, %v1106
      %v1108 = vpop.f32.mrb[0].mxu0
      %v1109 = vadd.f32 %v1040, %v1108
      %1110 = vmatprep.mubr.bf16.mxu0 0
      %1111 = vmatmul.mubr.bf16.gmra.mrb[0].mxu0 %v1066
      %v1112 = vpop.f32.mrb[0].mxu0
      %v1113 = vadd.f32 %v1045, %v1112
      %v1114 = vpop.f32.mrb[0].mxu0
      %v1115 = vadd.f32 %v1045, %v1114
      %v1116 = vpop.f32.mrb[0].mxu0
      %v1117 = vadd.f32 %v1050, %v1116
      %v1118 = vpop.f32.mrb[0].mxu0
      %v1119 = vadd.f32 %v1050, %v1118
      %1120 = vdwg.mxu0
      %v1121 = vmax.f32 %v1103, 0.0
      %v1122 = vmax.f32 %v1105, 0.0
      %v1123 = vmax.f32 %v1107, 0.0
      %v1124 = vmax.f32 %v1109, 0.0
      %v1125 = vmax.f32 %v1113, 0.0
      %v1126 = vmax.f32 %v1115, 0.0
      %v1127 = vmax.f32 %v1117, 0.0
      %v1128 = vmax.f32 %v1119, 0.0
      %v1129 = vadd.f32 %v1010, %v1121
      %v1130 = vadd.f32 %v1011, %v1122
      %v1131 = vadd.f32 %v1012, %v1123
      %v1132 = vadd.f32 %v1013, %v1124
      %v1133 = vadd.f32 %v1014, %v1125
      %v1134 = vadd.f32 %v1015, %v1126
      %v1135 = vadd.f32 %v1016, %v1127
      %v1136 = vadd.f32 %v1017, %v1128
      %s1137 = scalar_lea.vmem %s3, 60
      %v1138 = vld [vmem:[%s1137] sm:$0xf]
      %v1139 = vld [vmem:[%s1137 + $0x4] sm:$0xf]
      %v1140 = vld [vmem:[%s1137 + $0x8] sm:$0xf]
      %v1141 = vld [vmem:[%s1137 + $0xc] sm:$0xf]
      %v1142 = vld [vmem:[%s1137 + $0x10] sm:$0xf]
      %s1143 = scalar_lea.vmem %s4, 120
      %v1144 = vld [vmem:[%s1143] sm:$0xff]
      %v1145 = vld [vmem:[%s1143 + $0x8] sm:$0xff]
      %v1146 = vld [vmem:[%s1143 + $0x10] sm:$0xff]
      %v1147 = vld [vmem:[%s1143 + $0x18] sm:$0xff]
      %v1148 = vld [vmem:[%s1143 + $0x20] sm:$0xff]
      %v1149 = vpack.c.bf16 %v1131, %v1129
      %v1150 = vpack.c.bf16 %v1132, %v1130
      %v1151 = vpack.c.bf16 %v1135, %v1133
      %v1152 = vpack.c.bf16 %v1136, %v1134
      %1154 = vset.pattern.permute.xlu0 0
      %1155 = vperm.xlu0 %1154, %v1144
      %v1156 = vpop.permute.xlu0 %1155
      %1159 = vset.pattern.permute.xlu0 0
      %1160 = vperm.xlu0 %1159, %v1145
      %v1161 = vpop.permute.xlu0 %1160
      %1164 = vset.pattern.permute.xlu0 0
      %1165 = vperm.xlu0 %1164, %v1146
      %v1166 = vpop.permute.xlu0 %1165
      %1169 = vset.pattern.permute.xlu0 0
      %1170 = vperm.xlu0 %1169, %v1147
      %v1171 = vpop.permute.xlu0 %1170
      %1174 = vset.pattern.permute.xlu0 0
      %1175 = vperm.xlu0 %1174, %v1148
      %v1176 = vpop.permute.xlu0 %1175
      %v1183 = vunpack.c.l.b16 %v1138
      %v1184 = vunpack.c.l.b16 %v1139
      %v1185 = vunpack.c.l.b16 %v1140
      %v1186 = vunpack.c.l.b16 %v1141
      %v1187 = vunpack.c.l.b16 %v1142
      %v1188 = vpack.c.b16 %v1184, %v1183
      %v1189 = vpack.c.b16 %v1186, %v1185
      %v1190 = vpack.c.b16 %v1187, %v1187
      %v1192 = vsel %vm544, %v1188, 0
      %v1195 = vsel %vm544, %v1189, 0
      %v1198 = vsel %vm544, %v1190, 0
      %1200 = vmatprep.subr.bf16.mxu0 %v1150
      %1201 = vmatpush1.bf16.msra.mxu0 %v1149
      %1202 = vmatprep.subr.bf16.mxu0 %v1152
      %1203 = vmatpush1.bf16.msra.mxu0 %v1151
      %1204 = vmatprep.subr.bf16.mxu0 0
      %1205 = vmatpush1.bf16.msra.mxu0 0
      %1206 = vmatprep.subr.bf16.mxu0 0
      %1207 = vmatpush1.bf16.msra.mxu0 0
      %1208 = vmatprep.subr.bf16.mxu0 0
      %1209 = vmatpush1.bf16.msra.mxu0 0
      %1210 = vmatprep.subr.bf16.mxu0 0
      %1211 = vmatpush1.bf16.msra.mxu0 0
      %1212 = vmatprep.subr.bf16.mxu0 0
      %1213 = vmatpush1.bf16.msra.mxu0 0
      %1214 = vmatprep.subr.bf16.mxu0 0
      %1215 = vmatpush1.bf16.msra.mxu0 0
      %1216 = vmatprep.subr.bf16.mxu0 0
      %1217 = vmatpush1.bf16.msra.mxu0 0
      %1218 = vmatprep.subr.bf16.mxu0 0
      %1219 = vmatpush1.bf16.msra.mxu0 0
      %1220 = vmatprep.subr.bf16.mxu0 0
      %1221 = vmatpush1.bf16.msra.mxu0 0
      %1222 = vmatprep.subr.bf16.mxu0 0
      %1223 = vmatpush1.bf16.msra.mxu0 0
      %1224 = vmatprep.subr.bf16.mxu0 0
      %1225 = vmatpush1.bf16.msra.mxu0 0
      %1226 = vmatprep.subr.bf16.mxu0 0
      %1227 = vmatpush1.bf16.msra.mxu0 0
      %1228 = vmatprep.subr.bf16.mxu0 0
      %1229 = vmatpush1.bf16.msra.mxu0 0
      %1230 = vmatprep.subr.bf16.mxu0 0
      %1231 = vmatpush1.bf16.msra.mxu0 0
      %1232 = vmatprep.mubr.bf16.mxu0 0
      %1233 = vmatmul.mubr.bf16.gmra.mrb[0].mxu0 %v1192
      %v1234 = vpop.f32.mrb[0].mxu0
      %v1235 = vadd.f32 %v1156, %v1234
      %v1236 = vpop.f32.mrb[0].mxu0
      %v1237 = vadd.f32 %v1156, %v1236
      %v1238 = vpop.f32.mrb[0].mxu0
      %v1239 = vadd.f32 %v1161, %v1238
      %v1240 = vpop.f32.mrb[0].mxu0
      %v1241 = vadd.f32 %v1161, %v1240
      %1242 = vmatprep.mubr.bf16.mxu0 0
      %1243 = vmatmul.mubr.bf16.gmra.mrb[0].mxu0 %v1195
      %v1244 = vpop.f32.mrb[0].mxu0
      %v1245 = vadd.f32 %v1166, %v1244
      %v1246 = vpop.f32.mrb[0].mxu0
      %v1247 = vadd.f32 %v1166, %v1246
      %v1248 = vpop.f32.mrb[0].mxu0
      %v1249 = vadd.f32 %v1171, %v1248
      %v1250 = vpop.f32.mrb[0].mxu0
      %v1251 = vadd.f32 %v1171, %v1250
      %1252 = vmatprep.mubr.bf16.mxu0 0
      %1253 = vmatmul.mubr.bf16.gmra.mrb[0].mxu0 %v1198
      %v1254 = vpop.f32.mrb[0].mxu0
      %v1255 = vadd.f32 %v1176, %v1254
      %v1256 = vpop.f32.mrb[0].mxu0
      %v1257 = vadd.f32 %v1176, %v1256
      %v1258 = vpop.f32.mrb[0].mxu0
      %v1259 = vpop.f32.mrb[0].mxu0
      %1260 = vdwg.mxu0
      %1261 = vst [vmem:[%s370 + $0x30] sm:$0xff] %v1235
      %1262 = vst [vmem:[%s370 + $0x38] sm:$0xff] %v1237
      %v1263 = vmax.f32 %v1239, 0.0
      %v1264 = vmax.f32 %v1241, 0.0
      %v1265 = vmax.f32 %v1245, 0.0
      %v1266 = vmax.f32 %v1247, 0.0
      %v1267 = vmax.f32 %v1249, 0.0
      %v1268 = vmax.f32 %v1251, 0.0
      %v1269 = vmax.f32 %v1255, 0.0
      %v1270 = vmax.f32 %v1257, 0.0
      %s1271 = scalar_lea.vmem %s5, 32
      %v1272 = vld [vmem:[%s1271] sm:$0xf]
      %v1273 = vld [vmem:[%s1271 + $0x4] sm:$0xf]
      %v1274 = vld [vmem:[%s1271 + $0x8] sm:$0xf]
      %v1275 = vld [vmem:[%s1271 + $0xc] sm:$0xf]
      %s1276 = scalar_lea.vmem %s6, 64
      %v1277 = vld [vmem:[%s1276] sm:$0xff]
      %v1278 = vld [vmem:[%s1276 + $0x8] sm:$0xff]
      %v1279 = vld [vmem:[%s1276 + $0x10] sm:$0xff]
      %v1280 = vld [vmem:[%s1276 + $0x18] sm:$0xff]
      %v1281 = vpack.c.bf16 %v1265, %v1263
      %v1282 = vpack.c.bf16 %v1266, %v1264
      %v1283 = vpack.c.bf16 %v1269, %v1267
      %v1284 = vpack.c.bf16 %v1270, %v1268
      %1286 = vset.pattern.permute.xlu0 0
      %1287 = vperm.xlu0 %1286, %v1277
      %v1288 = vpop.permute.xlu0 %1287
      %1291 = vset.pattern.permute.xlu0 0
      %1292 = vperm.xlu0 %1291, %v1278
      %v1293 = vpop.permute.xlu0 %1292
      %1296 = vset.pattern.permute.xlu0 0
      %1297 = vperm.xlu0 %1296, %v1279
      %v1298 = vpop.permute.xlu0 %1297
      %1301 = vset.pattern.permute.xlu0 0
      %1302 = vperm.xlu0 %1301, %v1280
      %v1303 = vpop.permute.xlu0 %1302
      %v1309 = vunpack.c.l.b16 %v1272
      %v1310 = vunpack.c.l.b16 %v1273
      %v1311 = vunpack.c.l.b16 %v1274
      %v1312 = vunpack.c.l.b16 %v1275
      %v1313 = vpack.c.b16 %v1310, %v1309
      %v1314 = vpack.c.b16 %v1312, %v1311
      %v1316 = vsel %vm544, %v1313, 0
      %v1319 = vsel %vm544, %v1314, 0
      %1321 = vmatprep.subr.bf16.mxu0 %v1282
      %1322 = vmatpush1.bf16.msra.mxu0 %v1281
      %1323 = vmatprep.subr.bf16.mxu0 %v1284
      %1324 = vmatpush1.bf16.msra.mxu0 %v1283
      %1325 = vmatprep.subr.bf16.mxu0 0
      %1326 = vmatpush1.bf16.msra.mxu0 0
      %1327 = vmatprep.subr.bf16.mxu0 0
      %1328 = vmatpush1.bf16.msra.mxu0 0
      %1329 = vmatprep.subr.bf16.mxu0 0
      %1330 = vmatpush1.bf16.msra.mxu0 0
      %1331 = vmatprep.subr.bf16.mxu0 0
      %1332 = vmatpush1.bf16.msra.mxu0 0
      %1333 = vmatprep.subr.bf16.mxu0 0
      %1334 = vmatpush1.bf16.msra.mxu0 0
      %1335 = vmatprep.subr.bf16.mxu0 0
      %1336 = vmatpush1.bf16.msra.mxu0 0
      %1337 = vmatprep.subr.bf16.mxu0 0
      %1338 = vmatpush1.bf16.msra.mxu0 0
      %1339 = vmatprep.subr.bf16.mxu0 0
      %1340 = vmatpush1.bf16.msra.mxu0 0
      %1341 = vmatprep.subr.bf16.mxu0 0
      %1342 = vmatpush1.bf16.msra.mxu0 0
      %1343 = vmatprep.subr.bf16.mxu0 0
      %1344 = vmatpush1.bf16.msra.mxu0 0
      %1345 = vmatprep.subr.bf16.mxu0 0
      %1346 = vmatpush1.bf16.msra.mxu0 0
      %1347 = vmatprep.subr.bf16.mxu0 0
      %1348 = vmatpush1.bf16.msra.mxu0 0
      %1349 = vmatprep.subr.bf16.mxu0 0
      %1350 = vmatpush1.bf16.msra.mxu0 0
      %1351 = vmatprep.subr.bf16.mxu0 0
      %1352 = vmatpush1.bf16.msra.mxu0 0
      %1353 = vmatprep.mubr.bf16.mxu0 0
      %1354 = vmatmul.mubr.bf16.gmra.mrb[0].mxu0 %v1316
      %v1355 = vpop.f32.mrb[0].mxu0
      %v1356 = vadd.f32 %v1288, %v1355
      %v1357 = vpop.f32.mrb[0].mxu0
      %v1358 = vadd.f32 %v1288, %v1357
      %v1359 = vpop.f32.mrb[0].mxu0
      %v1360 = vadd.f32 %v1293, %v1359
      %v1361 = vpop.f32.mrb[0].mxu0
      %v1362 = vadd.f32 %v1293, %v1361
      %1363 = vmatprep.mubr.bf16.mxu0 0
      %1364 = vmatmul.mubr.bf16.gmra.mrb[0].mxu0 %v1319
      %v1365 = vpop.f32.mrb[0].mxu0
      %v1366 = vadd.f32 %v1298, %v1365
      %v1367 = vpop.f32.mrb[0].mxu0
      %v1368 = vadd.f32 %v1298, %v1367
      %v1369 = vpop.f32.mrb[0].mxu0
      %v1370 = vadd.f32 %v1303, %v1369
      %v1371 = vpop.f32.mrb[0].mxu0
      %v1372 = vadd.f32 %v1303, %v1371
      %1373 = vdwg.mxu0
      %v1374 = vmax.f32 %v1356, 0.0
      %v1375 = vmax.f32 %v1358, 0.0
      %v1376 = vmax.f32 %v1360, 0.0
      %v1377 = vmax.f32 %v1362, 0.0
      %v1378 = vmax.f32 %v1366, 0.0
      %v1379 = vmax.f32 %v1368, 0.0
      %v1380 = vmax.f32 %v1370, 0.0
      %v1381 = vmax.f32 %v1372, 0.0
      %v1382 = vadd.f32 %v1263, %v1374
      %v1383 = vadd.f32 %v1264, %v1375
      %v1384 = vadd.f32 %v1265, %v1376
      %v1385 = vadd.f32 %v1266, %v1377
      %v1386 = vadd.f32 %v1267, %v1378
      %v1387 = vadd.f32 %v1268, %v1379
      %v1388 = vadd.f32 %v1269, %v1380
      %v1389 = vadd.f32 %v1270, %v1381
      %v1390 = vld [vmem:[%s7] sm:$0xf]
      %v1391 = vld [vmem:[%s8] sm:$0xff]
      %v1392 = vpack.c.bf16 %v1384, %v1382
      %v1393 = vpack.c.bf16 %v1385, %v1383
      %v1394 = vpack.c.bf16 %v1388, %v1386
      %v1395 = vpack.c.bf16 %v1389, %v1387
      %1397 = vset.pattern.permute.xlu0 0
      %1398 = vperm.xlu0 %1397, %v1391
      %v1399 = vpop.permute.xlu0 %1398
      %v1402 = vsel %vm544, %v1390, 0
      %1404 = vmatprep.subr.bf16.mxu0 %v1393
      %1405 = vmatpush1.bf16.msra.mxu0 %v1392
      %1406 = vmatprep.subr.bf16.mxu0 %v1395
      %1407 = vmatpush1.bf16.msra.mxu0 %v1394
      %1408 = vmatprep.subr.bf16.mxu0 0
      %1409 = vmatpush1.bf16.msra.mxu0 0
      %1410 = vmatprep.subr.bf16.mxu0 0
      %1411 = vmatpush1.bf16.msra.mxu0 0
      %1412 = vmatprep.subr.bf16.mxu0 0
      %1413 = vmatpush1.bf16.msra.mxu0 0
      %1414 = vmatprep.subr.bf16.mxu0 0
      %1415 = vmatpush1.bf16.msra.mxu0 0
      %1416 = vmatprep.subr.bf16.mxu0 0
      %1417 = vmatpush1.bf16.msra.mxu0 0
      %1418 = vmatprep.subr.bf16.mxu0 0
      %1419 = vmatpush1.bf16.msra.mxu0 0
      %1420 = vmatprep.subr.bf16.mxu0 0
      %1421 = vmatpush1.bf16.msra.mxu0 0
      %1422 = vmatprep.subr.bf16.mxu0 0
      %1423 = vmatpush1.bf16.msra.mxu0 0
      %1424 = vmatprep.subr.bf16.mxu0 0
      %1425 = vmatpush1.bf16.msra.mxu0 0
      %1426 = vmatprep.subr.bf16.mxu0 0
      %1427 = vmatpush1.bf16.msra.mxu0 0
      %1428 = vmatprep.subr.bf16.mxu0 0
      %1429 = vmatpush1.bf16.msra.mxu0 0
      %1430 = vmatprep.subr.bf16.mxu0 0
      %1431 = vmatpush1.bf16.msra.mxu0 0
      %1432 = vmatprep.subr.bf16.mxu0 0
      %1433 = vmatpush1.bf16.msra.mxu0 0
      %1434 = vmatprep.subr.bf16.mxu0 0
      %1435 = vmatpush1.bf16.msra.mxu0 0
      %1436 = vmatprep.mubr.bf16.mxu0 0
      %1437 = vmatmul.mubr.bf16.gmra.mrb[0].mxu0 %v1402
      %v1438 = vpop.f32.mrb[0].mxu0
      %v1439 = vadd.f32 %v1399, %v1438
      %v1440 = vpop.f32.mrb[0].mxu0
      %v1441 = vadd.f32 %v1399, %v1440
      %v1442 = vpop.f32.mrb[0].mxu0
      %v1443 = vpop.f32.mrb[0].mxu0
      %1444 = vdwg.mxu0
      %1445 = vst [vmem:[%s370 + $0x40] sm:$0xff] %v1439
      %1446 = vst [vmem:[%s370 + $0x48] sm:$0xff] %v1441
      %s1447 = smul.u32 2, %s25
      %p1448 = scmp.lt.s32.totalorder %s24, 1
      %s1449 = scalar_select %p1448, %s24, 1
      %p1450 = scmp.lt.s32.totalorder %s1447, 1
      %s1451 = scalar_select %p1450, %s1447, 1
      %s1452 = smul.addr %s1449, 10
      %s1453 = sadd.s32 %s1451, %s1452
      %s1454 = smul.addr %s1453, 8
      %s1455 = scalar_lea.vmem %s9, %s1454
      // Predicated region
      $region57: #{derived_part_group_network_forward.1} parent=55 // pred_check
        %p1456 = pneg %p248
      $region58: #{derived_part_group_network_forward.1} parent=55 // pred_check_branch
        %1458 = sbr.rel (%p1456) target = $region60
      $region59: #{derived_part_group_network_forward.1} parent=55 // pred_region
        %s1459 = smul.u32 2, %s25
      $region60: #{derived_part_group_network_forward.1} parent=55 // pred_fallthru
        _
    $region56: #{derived_part_group_network_forward.1} parent=5 // pred_fallthru
      _
    %p1460 = scmp.le.s32.totalorder 2, %s15
    // Predicated region
    $region61: #{derived_part_group_network_forward.1} parent=5 // pred_check
      %p1461 = pneg %p1460
    $region62: #{derived_part_group_network_forward.1} parent=5 // pred_check_branch
      %1463 = sbr.rel (%p1461) target = $region64
    $region63: #{derived_part_group_network_forward.1} parent=5 // pred_region
      %s1464 = ssub.s32 %s15, 2
      // Predicated region
      $region65: #{derived_part_group_network_forward.1} parent=63 // pred_check
        %p1465 = pneg %p254
      $region66: #{derived_part_group_network_forward.1} parent=63 // pred_check_branch
        %1467 = sbr.rel (%p1465) target = $region68
      $region67: #{derived_part_group_network_forward.1} parent=63 // pred_region
        %s1468 = smul.u32 2, %s27
        %p1469 = scmp.lt.s32.totalorder %s26, 1
        %s1470 = scalar_select %p1469, %s26, 1
        %p1471 = scmp.lt.s32.totalorder %s1468, 1
        %s1472 = scalar_select %p1471, %s1468, 1
        %s1473 = smul.addr %s1470, 10
        %s1474 = sadd.s32 %s1472, %s1473
        %s1475 = smul.addr %s1474, 8
        %s1476 = scalar_lea.vmem %s9, %s1475
      $region68: #{derived_part_group_network_forward.1} parent=63 // pred_fallthru
        _
    $region64: #{derived_part_group_network_forward.1} parent=5 // pred_fallthru
      _
  $region6: #{derived_part_group_network_forward.1} parent=0 // loop_footer
    %s19 = sadd.s32 1, %s15
  $region7: #{derived_part_group_network_forward.1} parent=0 // loop_footer_branch
    %14 = sbr.rel target = $region3
  $region8: #{derived_part_group_network_forward.1} parent=0 // loop_exit
    _

</llo_original>
